<compile_context>
chip_gen: v6e
topology: v6e:2x2x1
jax: 0.10.0
libtpu: 0.0.40
codegen_flags: <defaults>
</compile_context>

<pallas_src>
import functools

import jax
import jax.numpy as jnp
from jax.experimental import pallas as pl
from jax.experimental.pallas import tpu as pltpu


def _round_up(x, m):
    return ((x + m - 1) // m) * m


# ----------------------------- Pallas kernel -------------------------------- #

def _conv_relu_pool_kernel(p_ref, w_ref, b_ref, o_ref):
    """out = relu( max_q( W @ P[q] ) + b )   (conv + ReLU + 2x2 max-pool, fused).

    p_ref : (4, K, tile_m)  stacked im2col patches (one slab per pool position)
    w_ref : (Cout, K)       conv weight, K ordered (cin, kh, kw)
    b_ref : (Cout, 1)       bias (f32)
    o_ref : (Cout, tile_m)  pooled activations (f32; lane dim = M -> dense stores)
    """
    w = w_ref[...]
    a0 = jnp.dot(w, p_ref[0], preferred_element_type=jnp.float32)
    a1 = jnp.dot(w, p_ref[1], preferred_element_type=jnp.float32)
    a2 = jnp.dot(w, p_ref[2], preferred_element_type=jnp.float32)
    a3 = jnp.dot(w, p_ref[3], preferred_element_type=jnp.float32)
    # relu(max_q(acc_q) + b) == max_q(relu(acc_q + b)) : single f32 epilogue.
    m = jnp.maximum(jnp.maximum(a0, a1), jnp.maximum(a2, a3))
    o_ref[...] = jnp.maximum(m + b_ref[...], 0.0).astype(o_ref.dtype)


def conv_relu_pool(patches, w_cm, b_col, *, tile_m=512):
    """patches: (4, K, M); w_cm: (Cout, K); b_col: (Cout, 1) f32  ->  (Cout, M) f32."""
    _, K, M = patches.shape
    Cout = w_cm.shape[0]

    tile = min(tile_m, _round_up(M, 128))          # lane-aligned tile over M
    m_pad = _round_up(M, tile)
    if m_pad != M:                                 # zero-pad; padded cols sliced off
        patches = jnp.pad(patches, ((0, 0), (0, 0), (0, m_pad - M)))
    grid = (m_pad // tile,)

    in_itemsize = jnp.dtype(patches.dtype).itemsize
    block_bytes = (4 * K * tile * in_itemsize      # patch tile
                   + Cout * K * in_itemsize        # weights
                   + Cout * 4                      # bias
                   + Cout * tile * 4)              # output tile
    # double-buffered blocks + slack, capped well under v7x's 64 MiB physical VMEM
    vmem_limit = int(min(max(4 * block_bytes + (2 << 20), 8 << 20), 48 << 20))

    cost = pl.CostEstimate(
        flops=2 * 4 * Cout * K * m_pad,
        transcendentals=0,
        bytes_accessed=int(patches.size * in_itemsize
                           + w_cm.size * in_itemsize
                           + b_col.size * 4
                           + Cout * m_pad * 4),
    )

    out = pl.pallas_call(
        _conv_relu_pool_kernel,
        out_shape=jax.ShapeDtypeStruct((Cout, m_pad), jnp.float32),
        grid=grid,
        in_specs=[
            pl.BlockSpec((4, K, tile), lambda i: (0, 0, i)),
            pl.BlockSpec((Cout, K), lambda i: (0, 0)),
            pl.BlockSpec((Cout, 1), lambda i: (0, 0)),
        ],
        out_specs=pl.BlockSpec((Cout, tile), lambda i: (0, i)),
        compiler_params=pltpu.CompilerParams(
            dimension_semantics=("parallel",),
            vmem_limit_bytes=vmem_limit,
        ),
        cost_estimate=cost,
    )(patches, w_cm, b_col)
    return out[:, :M]


# ------------------------------- JAX glue ------------------------------------ #

def pool_im2col_cm(a, kh, kw, sh, sw):
    """a: (C, N, H, W) channel-major.

    Returns one stacked patch tensor (4, C*kh*kw, N*Hp*Wp) -- one slab per 2x2
    pool-window position -- plus the pooled spatial size.  Only conv-output
    positions that survive the VALID 2x2/stride-2 max-pool are materialized.
    Every tap is an arithmetic-progression slice -> strided lax.slice, no gather.
    """
    C, N, H, W = a.shape
    Ho = (H - kh) // sh + 1
    Wo = (W - kw) // sw + 1
    Hp, Wp = Ho // 2, Wo // 2
    mats = []
    for dh_p in range(2):
        for dw_p in range(2):
            taps = []
            for dh in range(kh):
                for dw in range(kw):
                    r0 = dh_p * sh + dh
                    c0 = dw_p * sw + dw
                    sl = jax.lax.slice(
                        a,
                        (0, 0, r0, c0),
                        (C, N,
                         r0 + (Hp - 1) * 2 * sh + 1,
                         c0 + (Wp - 1) * 2 * sw + 1),
                        (1, 1, 2 * sh, 2 * sw))              # (C, N, Hp, Wp)
                    taps.append(sl)
            p = jnp.stack(taps, axis=1)                      # (C, kh*kw, N, Hp, Wp)
            mats.append(p.reshape(C * kh * kw, N * Hp * Wp))
    return jnp.stack(mats, axis=0), (Hp, Wp)                 # (4, K, M)


def stage(a, w_torch, b, kh, kw, sh, sw, *, compute_dtype, tile_m):
    """One conv+relu+maxpool stage, channel-major in/out.

    a: (Cin, N, H, W) -> (Cout, N, Hp, Wp).  w_torch: PyTorch (Cout, Cin, kh, kw).
    """
    C, N, H, W = a.shape
    Cout = w_torch.shape[0]
    patches, (Hp, Wp) = pool_im2col_cm(a.astype(compute_dtype), kh, kw, sh, sw)
    w_cm = w_torch.reshape(Cout, C * kh * kw).astype(compute_dtype)  # (cin,kh,kw) order
    K = C * kh * kw
    k_pad = _round_up(K, 8)
    if k_pad != K:   # zero-pad contraction dim to a sublane multiple (exact)
        patches = jnp.pad(patches, ((0, 0), (0, k_pad - K), (0, 0)))
        w_cm = jnp.pad(w_cm, ((0, 0), (0, k_pad - K)))
    out = conv_relu_pool(patches, w_cm, b.reshape(Cout, 1).astype(jnp.float32),
                         tile_m=tile_m)
    return out.reshape(Cout, N, Hp, Wp)


def regional_cnn_forward(x, params, region_words, *, compute_dtype=jnp.bfloat16,
                         tile_m=512):
    """x: (B, S, E) with S = num_regions * region_words. Returns (B, R, features)."""
    B, S, E = x.shape
    R = S // region_words
    w1, b1, w2, b2, w3, b3 = params
    a = x.reshape(B * R, region_words, E)[None]              # (C=1, N, H, W)
    a = stage(a, w1, b1, 3, 5, 1, 3, compute_dtype=compute_dtype, tile_m=tile_m)
    a = stage(a, w2, b2, 2, 3, 1, 2, compute_dtype=compute_dtype, tile_m=tile_m)
    a = stage(a, w3, b3, 1, 3, 1, 1, compute_dtype=compute_dtype, tile_m=tile_m)
    C3, N, Hp, Wp = a.shape
    # torch x.view(batch, -1) flattens per-sample in (C, H, W) order; channel-major
    # kernel output gives that directly (just move N to the front).
    y = jnp.transpose(a, (1, 0, 2, 3)).reshape(B, R, C3 * Hp * Wp)
    # TODO(synk): nn.Dropout treated as identity (inference mode); train-mode RNG mask not implemented.
    return y


# ------------------------- params & pure-JAX reference ----------------------- #

def init_params(key):
    ks = jax.random.split(key, 6)

    def u(k, shape, fan_in):
        bound = 1.0 / (fan_in ** 0.5)
        return jax.random.uniform(k, shape, jnp.float32, -bound, bound)

    w1 = u(ks[0], (32, 1, 3, 5), 1 * 3 * 5)
    b1 = u(ks[1], (32,), 1 * 3 * 5)
    w2 = u(ks[2], (32, 32, 2, 3), 32 * 2 * 3)
    b2 = u(ks[3], (32,), 32 * 2 * 3)
    w3 = u(ks[4], (16, 32, 1, 3), 32 * 1 * 3)
    b3 = u(ks[5], (16,), 32 * 1 * 3)
    return (w1, b1, w2, b2, w3, b3)


def reference_forward(x, params, region_words):
    B, S, E = x.shape
    R = S // region_words
    w1, b1, w2, b2, w3, b3 = params
    y = x.reshape(B * R, 1, region_words, E)                 # NCHW

    def conv(y, w, b, stride):
        out = jax.lax.conv_general_dilated(
            y, w, stride, "VALID",
            dimension_numbers=("NCHW", "OIHW", "NCHW"),
            precision=jax.lax.Precision.HIGHEST)
        return jax.nn.relu(out + b[None, :, None, None])

    def pool(y):
        return jax.lax.reduce_window(y, -jnp.inf, jax.lax.max,
                                     (1, 1, 2, 2), (1, 1, 2, 2), "VALID")

    y = pool(conv(y, w1, b1, (1, 3)))
    y = pool(conv(y, w2, b2, (1, 2)))
    y = pool(conv(y, w3, b3, (1, 1)))
    return y.reshape(B, R, -1)


# ---------------------------------- main ------------------------------------- #

if __name__ == "__main__":
    key = jax.random.PRNGKey(0)
    kx, kp = jax.random.split(key)

    # Small but conv/pool-valid; large enough that stage 1 uses a multi-tile grid.
    B, region_words, num_regions, emb = 4, 12, 3, 128
    S = num_regions * region_words
    x = jax.random.normal(kx, (B, S, emb), jnp.float32)
    params = init_params(kp)

    ref = reference_forward(x, params, region_words)
    ref_scale = float(jnp.max(jnp.abs(ref))) + 1e-6

    # f32 operands: structural check of the fused kernel (tolerance allows for
    # MXU f32 pass-decomposition differences vs Precision.HIGHEST reference).
    out_f32 = jax.jit(functools.partial(
        regional_cnn_forward, region_words=region_words,
        compute_dtype=jnp.float32))(x, params)
    out_f32 = jax.block_until_ready(out_f32)
    assert out_f32.shape == ref.shape == (B, num_regions, 16), (out_f32.shape, ref.shape)
    rel_err_f32 = float(jnp.max(jnp.abs(out_f32 - ref)) / ref_scale)
    assert rel_err_f32 < 2e-2, f"f32 path error too large vs reference: {rel_err_f32}"

    # bf16 MXU operands (recommended on v6e/v7x): halves HBM traffic of the
    # memory-bound stages; f32 accumulate + f32 epilogue.  Looser tolerance.
    out_bf16 = jax.jit(functools.partial(
        regional_cnn_forward, region_words=region_words,
        compute_dtype=jnp.bfloat16))(x, params)
    out_bf16 = jax.block_until_ready(out_bf16)
    rel_err_bf16 = float(jnp.max(jnp.abs(out_bf16 - ref)) / ref_scale)
    assert rel_err_bf16 < 5e-2, f"bf16 path error too large: {rel_err_bf16}"

    print("KERNEL_OK")
</pallas_src>

<mosaic_0001>
module attributes {stable_mosaic.version = 11 : i64} {
  func.func @_conv_relu_pool_kernel(%arg0: i32, %arg1: memref<4x16x512xf32, #tpu.memory_space<vmem>>, %arg2: memref<32x16xf32, #tpu.memory_space<vmem>>, %arg3: memref<32x1xf32, #tpu.memory_space<vmem>>, %arg4: memref<32x512xf32, #tpu.memory_space<vmem>>) attributes {dimension_semantics = [#tpu.dimension_semantics<parallel>], iteration_bounds = array<i64: 3>, scalar_prefetch = 0 : i64, scratch_operands = 0 : i64, tpu.core_type = #tpu.core_type<tc>, window_params = [{transform_indices = @transform_0, window_bounds = array<i64: 4, 16, 512>}, {pipeline_mode = #tpu.pipeline_mode<synchronous>, transform_indices = @transform_1, window_bounds = array<i64: 32, 16>}, {pipeline_mode = #tpu.pipeline_mode<synchronous>, transform_indices = @transform_2, window_bounds = array<i64: 32, 1>}, {transform_indices = @transform_3, window_bounds = array<i64: 32, 512>}]} {
    %c0 = arith.constant 0 : index
    %c0_0 = arith.constant 0 : index
    %0 = vector.load %arg2[%c0, %c0_0] : memref<32x16xf32, #tpu.memory_space<vmem>>, vector<32x16xf32>
    %c0_1 = arith.constant 0 : index
    %c0_2 = arith.constant 0 : index
    %c0_3 = arith.constant 0 : index
    %1 = vector.load %arg1[%c0_1, %c0_2, %c0_3] : memref<4x16x512xf32, #tpu.memory_space<vmem>>, vector<1x16x512xf32>
    %2 = vector.shape_cast %1 : vector<1x16x512xf32> to vector<16x512xf32>
    %cst = arith.constant dense<0.000000e+00> : vector<32x512xf32>
    %3 = tpu.matmul %0, %2, %cst {dimension_numbers = #tpu.dot_dimension_numbers<[1], [0], [0], [1], [0, 0, 1, 1], [], []>} : vector<32x16xf32>, vector<16x512xf32>, vector<32x512xf32> -> vector<32x512xf32>
    %c1 = arith.constant 1 : index
    %c0_4 = arith.constant 0 : index
    %c0_5 = arith.constant 0 : index
    %4 = vector.load %arg1[%c1, %c0_4, %c0_5] : memref<4x16x512xf32, #tpu.memory_space<vmem>>, vector<1x16x512xf32>
    %5 = vector.shape_cast %4 : vector<1x16x512xf32> to vector<16x512xf32>
    %cst_6 = arith.constant dense<0.000000e+00> : vector<32x512xf32>
    %6 = tpu.matmul %0, %5, %cst_6 {dimension_numbers = #tpu.dot_dimension_numbers<[1], [0], [0], [1], [0, 0, 1, 1], [], []>} : vector<32x16xf32>, vector<16x512xf32>, vector<32x512xf32> -> vector<32x512xf32>
    %c2 = arith.constant 2 : index
    %c0_7 = arith.constant 0 : index
    %c0_8 = arith.constant 0 : index
    %7 = vector.load %arg1[%c2, %c0_7, %c0_8] : memref<4x16x512xf32, #tpu.memory_space<vmem>>, vector<1x16x512xf32>
    %8 = vector.shape_cast %7 : vector<1x16x512xf32> to vector<16x512xf32>
    %cst_9 = arith.constant dense<0.000000e+00> : vector<32x512xf32>
    %9 = tpu.matmul %0, %8, %cst_9 {dimension_numbers = #tpu.dot_dimension_numbers<[1], [0], [0], [1], [0, 0, 1, 1], [], []>} : vector<32x16xf32>, vector<16x512xf32>, vector<32x512xf32> -> vector<32x512xf32>
    %c3 = arith.constant 3 : index
    %c0_10 = arith.constant 0 : index
    %c0_11 = arith.constant 0 : index
    %10 = vector.load %arg1[%c3, %c0_10, %c0_11] : memref<4x16x512xf32, #tpu.memory_space<vmem>>, vector<1x16x512xf32>
    %11 = vector.shape_cast %10 : vector<1x16x512xf32> to vector<16x512xf32>
    %cst_12 = arith.constant dense<0.000000e+00> : vector<32x512xf32>
    %12 = tpu.matmul %0, %11, %cst_12 {dimension_numbers = #tpu.dot_dimension_numbers<[1], [0], [0], [1], [0, 0, 1, 1], [], []>} : vector<32x16xf32>, vector<16x512xf32>, vector<32x512xf32> -> vector<32x512xf32>
    %13 = arith.maximumf %3, %6 : vector<32x512xf32>
    %14 = arith.maximumf %9, %12 : vector<32x512xf32>
    %15 = arith.maximumf %13, %14 : vector<32x512xf32>
    %c0_13 = arith.constant 0 : index
    %c0_14 = arith.constant 0 : index
    %16 = vector.load %arg3[%c0_13, %c0_14] : memref<32x1xf32, #tpu.memory_space<vmem>>, vector<32x1xf32>
    %17 = vector.broadcast %16 : vector<32x1xf32> to vector<32x512xf32>
    %18 = arith.addf %15, %17 : vector<32x512xf32>
    %cst_15 = arith.constant 0.000000e+00 : f32
    %19 = vector.broadcast %cst_15 : f32 to vector<32x512xf32>
    %20 = arith.maximumf %18, %19 : vector<32x512xf32>
    %c0_16 = arith.constant 0 : index
    %c0_17 = arith.constant 0 : index
    %21 = vector.load %arg4[%c0_16, %c0_17] : memref<32x512xf32, #tpu.memory_space<vmem>>, vector<32x512xf32>
    tpu.vector_store %arg4[%c0_16, %c0_17], %20 {strides = array<i32>} : memref<32x512xf32, #tpu.memory_space<vmem>>, vector<32x512xf32>,
    return
  }
  func.func @transform_0(%arg0: i32) -> (i32, i32, i32) {
    %c0_i32 = arith.constant 0 : i32
    %c0_i32_0 = arith.constant 0 : i32
    %c0_i32_1 = arith.constant 0 : i32
    return %c0_i32, %c0_i32_0, %arg0 : i32, i32, i32
  }
  func.func @transform_1(%arg0: i32) -> (i32, i32) {
    %c0_i32 = arith.constant 0 : i32
    %c0_i32_0 = arith.constant 0 : i32
    %c0_i32_1 = arith.constant 0 : i32
    return %c0_i32, %c0_i32_0 : i32, i32
  }
  func.func @transform_2(%arg0: i32) -> (i32, i32) {
    %c0_i32 = arith.constant 0 : i32
    %c0_i32_0 = arith.constant 0 : i32
    %c0_i32_1 = arith.constant 0 : i32
    return %c0_i32, %c0_i32_0 : i32, i32
  }
  func.func @transform_3(%arg0: i32) -> (i32, i32) {
    %c0_i32 = arith.constant 0 : i32
    %c0_i32_0 = arith.constant 0 : i32
    return %c0_i32, %arg0 : i32, i32
  }
}

module attributes {stable_mosaic.version = 11 : i64} {
  func.func @_conv_relu_pool_kernel(%arg0: i32, %arg1: memref<4x192x128xf32, #tpu.memory_space<vmem>>, %arg2: memref<32x192xf32, #tpu.memory_space<vmem>>, %arg3: memref<32x1xf32, #tpu.memory_space<vmem>>, %arg4: memref<32x128xf32, #tpu.memory_space<vmem>>) attributes {dimension_semantics = [#tpu.dimension_semantics<parallel>], iteration_bounds = array<i64: 1>, scalar_prefetch = 0 : i64, scratch_operands = 0 : i64, tpu.core_type = #tpu.core_type<tc>, window_params = [{transform_indices = @transform_0, window_bounds = array<i64: 4, 192, 128>}, {pipeline_mode = #tpu.pipeline_mode<synchronous>, transform_indices = @transform_1, window_bounds = array<i64: 32, 192>}, {pipeline_mode = #tpu.pipeline_mode<synchronous>, transform_indices = @transform_2, window_bounds = array<i64: 32, 1>}, {transform_indices = @transform_3, window_bounds = array<i64: 32, 128>}]} {
    %c0 = arith.constant 0 : index
    %c0_0 = arith.constant 0 : index
    %0 = vector.load %arg2[%c0, %c0_0] : memref<32x192xf32, #tpu.memory_space<vmem>>, vector<32x192xf32>
    %c0_1 = arith.constant 0 : index
    %c0_2 = arith.constant 0 : index
    %c0_3 = arith.constant 0 : index
    %1 = vector.load %arg1[%c0_1, %c0_2, %c0_3] : memref<4x192x128xf32, #tpu.memory_space<vmem>>, vector<1x192x128xf32>
    %2 = vector.shape_cast %1 : vector<1x192x128xf32> to vector<192x128xf32>
    %cst = arith.constant dense<0.000000e+00> : vector<32x128xf32>
    %3 = tpu.matmul %0, %2, %cst {dimension_numbers = #tpu.dot_dimension_numbers<[1], [0], [0], [1], [0, 0, 1, 1], [], []>} : vector<32x192xf32>, vector<192x128xf32>, vector<32x128xf32> -> vector<32x128xf32>
    %c1 = arith.constant 1 : index
    %c0_4 = arith.constant 0 : index
    %c0_5 = arith.constant 0 : index
    %4 = vector.load %arg1[%c1, %c0_4, %c0_5] : memref<4x192x128xf32, #tpu.memory_space<vmem>>, vector<1x192x128xf32>
    %5 = vector.shape_cast %4 : vector<1x192x128xf32> to vector<192x128xf32>
    %cst_6 = arith.constant dense<0.000000e+00> : vector<32x128xf32>
    %6 = tpu.matmul %0, %5, %cst_6 {dimension_numbers = #tpu.dot_dimension_numbers<[1], [0], [0], [1], [0, 0, 1, 1], [], []>} : vector<32x192xf32>, vector<192x128xf32>, vector<32x128xf32> -> vector<32x128xf32>
    %c2 = arith.constant 2 : index
    %c0_7 = arith.constant 0 : index
    %c0_8 = arith.constant 0 : index
    %7 = vector.load %arg1[%c2, %c0_7, %c0_8] : memref<4x192x128xf32, #tpu.memory_space<vmem>>, vector<1x192x128xf32>
    %8 = vector.shape_cast %7 : vector<1x192x128xf32> to vector<192x128xf32>
    %cst_9 = arith.constant dense<0.000000e+00> : vector<32x128xf32>
    %9 = tpu.matmul %0, %8, %cst_9 {dimension_numbers = #tpu.dot_dimension_numbers<[1], [0], [0], [1], [0, 0, 1, 1], [], []>} : vector<32x192xf32>, vector<192x128xf32>, vector<32x128xf32> -> vector<32x128xf32>
    %c3 = arith.constant 3 : index
    %c0_10 = arith.constant 0 : index
    %c0_11 = arith.constant 0 : index
    %10 = vector.load %arg1[%c3, %c0_10, %c0_11] : memref<4x192x128xf32, #tpu.memory_space<vmem>>, vector<1x192x128xf32>
    %11 = vector.shape_cast %10 : vector<1x192x128xf32> to vector<192x128xf32>
    %cst_12 = arith.constant dense<0.000000e+00> : vector<32x128xf32>
    %12 = tpu.matmul %0, %11, %cst_12 {dimension_numbers = #tpu.dot_dimension_numbers<[1], [0], [0], [1], [0, 0, 1, 1], [], []>} : vector<32x192xf32>, vector<192x128xf32>, vector<32x128xf32> -> vector<32x128xf32>
    %13 = arith.maximumf %3, %6 : vector<32x128xf32>
    %14 = arith.maximumf %9, %12 : vector<32x128xf32>
    %15 = arith.maximumf %13, %14 : vector<32x128xf32>
    %c0_13 = arith.constant 0 : index
    %c0_14 = arith.constant 0 : index
    %16 = vector.load %arg3[%c0_13, %c0_14] : memref<32x1xf32, #tpu.memory_space<vmem>>, vector<32x1xf32>
    %17 = vector.broadcast %16 : vector<32x1xf32> to vector<32x128xf32>
    %18 = arith.addf %15, %17 : vector<32x128xf32>
    %cst_15 = arith.constant 0.000000e+00 : f32
    %19 = vector.broadcast %cst_15 : f32 to vector<32x128xf32>
    %20 = arith.maximumf %18, %19 : vector<32x128xf32>
    %c0_16 = arith.constant 0 : index
    %c0_17 = arith.constant 0 : index
    %21 = vector.load %arg4[%c0_16, %c0_17] : memref<32x128xf32, #tpu.memory_space<vmem>>, vector<32x128xf32>
    tpu.vector_store %arg4[%c0_16, %c0_17], %20 {strides = array<i32>} : memref<32x128xf32, #tpu.memory_space<vmem>>, vector<32x128xf32>,
    return
  }
  func.func @transform_0(%arg0: i32) -> (i32, i32, i32) {
    %c0_i32 = arith.constant 0 : i32
    %c0_i32_0 = arith.constant 0 : i32
    %c0_i32_1 = arith.constant 0 : i32
    return %c0_i32, %c0_i32_0, %arg0 : i32, i32, i32
  }
  func.func @transform_1(%arg0: i32) -> (i32, i32) {
    %c0_i32 = arith.constant 0 : i32
    %c0_i32_0 = arith.constant 0 : i32
    %c0_i32_1 = arith.constant 0 : i32
    return %c0_i32, %c0_i32_0 : i32, i32
  }
  func.func @transform_2(%arg0: i32) -> (i32, i32) {
    %c0_i32 = arith.constant 0 : i32
    %c0_i32_0 = arith.constant 0 : i32
    %c0_i32_1 = arith.constant 0 : i32
    return %c0_i32, %c0_i32_0 : i32, i32
  }
  func.func @transform_3(%arg0: i32) -> (i32, i32) {
    %c0_i32 = arith.constant 0 : i32
    %c0_i32_0 = arith.constant 0 : i32
    return %c0_i32, %arg0 : i32, i32
  }
}

module attributes {stable_mosaic.version = 11 : i64} {
  func.func @_conv_relu_pool_kernel(%arg0: i32, %arg1: memref<4x96x128xf32, #tpu.memory_space<vmem>>, %arg2: memref<16x96xf32, #tpu.memory_space<vmem>>, %arg3: memref<16x1xf32, #tpu.memory_space<vmem>>, %arg4: memref<16x128xf32, #tpu.memory_space<vmem>>) attributes {dimension_semantics = [#tpu.dimension_semantics<parallel>], iteration_bounds = array<i64: 1>, scalar_prefetch = 0 : i64, scratch_operands = 0 : i64, tpu.core_type = #tpu.core_type<tc>, window_params = [{transform_indices = @transform_0, window_bounds = array<i64: 4, 96, 128>}, {pipeline_mode = #tpu.pipeline_mode<synchronous>, transform_indices = @transform_1, window_bounds = array<i64: 16, 96>}, {pipeline_mode = #tpu.pipeline_mode<synchronous>, transform_indices = @transform_2, window_bounds = array<i64: 16, 1>}, {transform_indices = @transform_3, window_bounds = array<i64: 16, 128>}]} {
    %c0 = arith.constant 0 : index
    %c0_0 = arith.constant 0 : index
    %0 = vector.load %arg2[%c0, %c0_0] : memref<16x96xf32, #tpu.memory_space<vmem>>, vector<16x96xf32>
    %c0_1 = arith.constant 0 : index
    %c0_2 = arith.constant 0 : index
    %c0_3 = arith.constant 0 : index
    %1 = vector.load %arg1[%c0_1, %c0_2, %c0_3] : memref<4x96x128xf32, #tpu.memory_space<vmem>>, vector<1x96x128xf32>
    %2 = vector.shape_cast %1 : vector<1x96x128xf32> to vector<96x128xf32>
    %cst = arith.constant dense<0.000000e+00> : vector<16x128xf32>
    %3 = tpu.matmul %0, %2, %cst {dimension_numbers = #tpu.dot_dimension_numbers<[1], [0], [0], [1], [0, 0, 1, 1], [], []>} : vector<16x96xf32>, vector<96x128xf32>, vector<16x128xf32> -> vector<16x128xf32>
    %c1 = arith.constant 1 : index
    %c0_4 = arith.constant 0 : index
    %c0_5 = arith.constant 0 : index
    %4 = vector.load %arg1[%c1, %c0_4, %c0_5] : memref<4x96x128xf32, #tpu.memory_space<vmem>>, vector<1x96x128xf32>
    %5 = vector.shape_cast %4 : vector<1x96x128xf32> to vector<96x128xf32>
    %cst_6 = arith.constant dense<0.000000e+00> : vector<16x128xf32>
    %6 = tpu.matmul %0, %5, %cst_6 {dimension_numbers = #tpu.dot_dimension_numbers<[1], [0], [0], [1], [0, 0, 1, 1], [], []>} : vector<16x96xf32>, vector<96x128xf32>, vector<16x128xf32> -> vector<16x128xf32>
    %c2 = arith.constant 2 : index
    %c0_7 = arith.constant 0 : index
    %c0_8 = arith.constant 0 : index
    %7 = vector.load %arg1[%c2, %c0_7, %c0_8] : memref<4x96x128xf32, #tpu.memory_space<vmem>>, vector<1x96x128xf32>
    %8 = vector.shape_cast %7 : vector<1x96x128xf32> to vector<96x128xf32>
    %cst_9 = arith.constant dense<0.000000e+00> : vector<16x128xf32>
    %9 = tpu.matmul %0, %8, %cst_9 {dimension_numbers = #tpu.dot_dimension_numbers<[1], [0], [0], [1], [0, 0, 1, 1], [], []>} : vector<16x96xf32>, vector<96x128xf32>, vector<16x128xf32> -> vector<16x128xf32>
    %c3 = arith.constant 3 : index
    %c0_10 = arith.constant 0 : index
    %c0_11 = arith.constant 0 : index
    %10 = vector.load %arg1[%c3, %c0_10, %c0_11] : memref<4x96x128xf32, #tpu.memory_space<vmem>>, vector<1x96x128xf32>
    %11 = vector.shape_cast %10 : vector<1x96x128xf32> to vector<96x128xf32>
    %cst_12 = arith.constant dense<0.000000e+00> : vector<16x128xf32>
    %12 = tpu.matmul %0, %11, %cst_12 {dimension_numbers = #tpu.dot_dimension_numbers<[1], [0], [0], [1], [0, 0, 1, 1], [], []>} : vector<16x96xf32>, vector<96x128xf32>, vector<16x128xf32> -> vector<16x128xf32>
    %13 = arith.maximumf %3, %6 : vector<16x128xf32>
    %14 = arith.maximumf %9, %12 : vector<16x128xf32>
    %15 = arith.maximumf %13, %14 : vector<16x128xf32>
    %c0_13 = arith.constant 0 : index
    %c0_14 = arith.constant 0 : index
    %16 = vector.load %arg3[%c0_13, %c0_14] : memref<16x1xf32, #tpu.memory_space<vmem>>, vector<16x1xf32>
    %17 = vector.broadcast %16 : vector<16x1xf32> to vector<16x128xf32>
    %18 = arith.addf %15, %17 : vector<16x128xf32>
    %cst_15 = arith.constant 0.000000e+00 : f32
    %19 = vector.broadcast %cst_15 : f32 to vector<16x128xf32>
    %20 = arith.maximumf %18, %19 : vector<16x128xf32>
    %c0_16 = arith.constant 0 : index
    %c0_17 = arith.constant 0 : index
    %21 = vector.load %arg4[%c0_16, %c0_17] : memref<16x128xf32, #tpu.memory_space<vmem>>, vector<16x128xf32>
    tpu.vector_store %arg4[%c0_16, %c0_17], %20 {strides = array<i32>} : memref<16x128xf32, #tpu.memory_space<vmem>>, vector<16x128xf32>,
    return
  }
  func.func @transform_0(%arg0: i32) -> (i32, i32, i32) {
    %c0_i32 = arith.constant 0 : i32
    %c0_i32_0 = arith.constant 0 : i32
    %c0_i32_1 = arith.constant 0 : i32
    return %c0_i32, %c0_i32_0, %arg0 : i32, i32, i32
  }
  func.func @transform_1(%arg0: i32) -> (i32, i32) {
    %c0_i32 = arith.constant 0 : i32
    %c0_i32_0 = arith.constant 0 : i32
    %c0_i32_1 = arith.constant 0 : i32
    return %c0_i32, %c0_i32_0 : i32, i32
  }
  func.func @transform_2(%arg0: i32) -> (i32, i32) {
    %c0_i32 = arith.constant 0 : i32
    %c0_i32_0 = arith.constant 0 : i32
    %c0_i32_1 = arith.constant 0 : i32
    return %c0_i32, %c0_i32_0 : i32, i32
  }
  func.func @transform_3(%arg0: i32) -> (i32, i32) {
    %c0_i32 = arith.constant 0 : i32
    %c0_i32_0 = arith.constant 0 : i32
    return %c0_i32, %arg0 : i32, i32
  }
}

</mosaic_0001>

<llo_original>
// kernel: regional_cnn_forward.3
$region0: #{regional_cnn_forward.3}
  #allocation0 [shape = 'u32[]', space=smem, size = 0x4, offset = 0x4, fixed_abs, tag = 'smem constant byte address 0x4 - core index']
  #allocation1 [shape = 'u32[144,128]{1,0:T(1,128)}', space=vmem, size = 0x12000, scoped, tag = 'internal scratch']
  %s0 = inlined_call_operand.vmem [shape: f32[4,16,1536], index: 0, kind: input, shape index: {}]
  %s1 = inlined_call_operand.vmem [shape: f32[32,16], index: 1, kind: input, shape index: {}]
  %s2 = inlined_call_operand.vmem [shape: f32[32,1], index: 2, kind: input, shape index: {}]
  %s3 = inlined_call_operand.vmem [shape: f32[32,1536], index: 3, kind: output, shape index: {}]
  %s4 = sld [smem:[#allocation0]]
  $region87: #{regional_cnn_forward.3} parent=0
    _
  %s6 = ssub.s32 1, %s4
  %s7 = scalar_select 0, %s6, %s4
  $region1: #{regional_cnn_forward.3} parent=0
    #allocation2 [shape = 'u8[262144]{0}', space=vmem, size = 0x40000, scoped, tag = 'input window, operand 0']
    #allocation3 [shape = 'u8[131072]{0}', space=vmem, size = 0x20000, scoped, tag = 'output window, operand 0']
    loop: start=0, step=1, limit=5
    $region2: #{regional_cnn_forward.3} parent=1 // loop_pre_header
      _
    $region3: #{regional_cnn_forward.3} parent=1 // loop_header
      %s9 = sphi 0, %s13
      %p10 = scmp.ge.s32.totalorder %s9, 5
      %s19 = sphi 0, %s21
      %s22 = sphi 0, %s19
      %s23 = sphi 0, %s22
      %s39 = sphi 0, %s23
      %s43 = sphi 0, %s43
      %s45 = sphi 0, %s43
      %s46 = sphi 0, %s45
      %s60 = sphi 0, %s46
      %s64 = sphi 0, %s64
      %s66 = sphi 0, %s64
      %s67 = sphi 0, %s66
      %s81 = sphi 0, %s67
      %s87 = sphi 0, %s89
      %s90 = sphi 0, %s87
      %s91 = sphi 0, %s90
      %s107 = sphi 0, %s91
    $region4: #{regional_cnn_forward.3} parent=1 // loop_header_branch
      %12 = sbr.rel (%p10) target = $region8
    $region5: #{regional_cnn_forward.3} parent=1 // loop_body
      %s14 = ssub.s32 %s9, 1
      %s15 = ssub.s32 %s9, 2
      %s16 = sadd.s32 %s9, 1
      %s17 = ssub.s32 %s9, %s16
      %p18 = scmp.eq.s32.totalorder %s17, 0
      %s20 = sadd.s32 %s19, 1
      %s21 = scalar_select %p18, %s19, %s20
      %p24 = pneg %p18
      %p25 = scmp.eq.s32.totalorder %s9, 2
      %p26 = por %p24, %p25
      %p27 = scmp.ne.s32.totalorder %s19, %s22
      %p28 = scmp.eq.s32.totalorder %s9, 0
      %p29 = por %p27, %p28
      %p30 = scmp.ne.s32.totalorder %s19, %s22
      %p31 = scmp.eq.s32.totalorder %s14, 2
      %p32 = por %p30, %p31
      %p33 = scmp.ne.s32.totalorder %s22, %s23
      %p34 = scmp.eq.s32.totalorder %s14, 0
      %p35 = por %p33, %p34
      %p36 = scmp.ne.s32.totalorder %s22, %s23
      %p37 = scmp.eq.s32.totalorder %s15, 2
      %p38 = por %p36, %p37
      %p40 = scmp.ne.s32.totalorder %s23, %s39
      %p41 = scmp.eq.s32.totalorder %s15, 0
      %p42 = por %p40, %p41
      %s44 = sadd.s32 %s43, 1
      %p47 = scmp.eq.s32.totalorder %s9, 2
      %p48 = scmp.ne.s32.totalorder %s43, %s45
      %p49 = scmp.eq.s32.totalorder %s9, 0
      %p50 = por %p48, %p49
      %p51 = scmp.ne.s32.totalorder %s43, %s45
      %p52 = scmp.eq.s32.totalorder %s14, 2
      %p53 = por %p51, %p52
      %p54 = scmp.ne.s32.totalorder %s45, %s46
      %p55 = scmp.eq.s32.totalorder %s14, 0
      %p56 = por %p54, %p55
      %p57 = scmp.ne.s32.totalorder %s45, %s46
      %p58 = scmp.eq.s32.totalorder %s15, 2
      %p59 = por %p57, %p58
      %p61 = scmp.ne.s32.totalorder %s46, %s60
      %p62 = scmp.eq.s32.totalorder %s15, 0
      %p63 = por %p61, %p62
      %s65 = sadd.s32 %s64, 1
      %p68 = scmp.eq.s32.totalorder %s9, 2
      %p69 = scmp.ne.s32.totalorder %s64, %s66
      %p70 = scmp.eq.s32.totalorder %s9, 0
      %p71 = por %p69, %p70
      %p72 = scmp.ne.s32.totalorder %s64, %s66
      %p73 = scmp.eq.s32.totalorder %s14, 2
      %p74 = por %p72, %p73
      %p75 = scmp.ne.s32.totalorder %s66, %s67
      %p76 = scmp.eq.s32.totalorder %s14, 0
      %p77 = por %p75, %p76
      %p78 = scmp.ne.s32.totalorder %s66, %s67
      %p79 = scmp.eq.s32.totalorder %s15, 2
      %p80 = por %p78, %p79
      %p82 = scmp.ne.s32.totalorder %s67, %s81
      %p83 = scmp.eq.s32.totalorder %s15, 0
      %p84 = por %p82, %p83
      %s85 = ssub.s32 %s9, %s16
      %p86 = scmp.eq.s32.totalorder %s85, 0
      %s88 = sadd.s32 %s87, 1
      %s89 = scalar_select %p86, %s87, %s88
      %p92 = pneg %p86
      %p93 = scmp.eq.s32.totalorder %s9, 2
      %p94 = por %p92, %p93
      %p95 = scmp.ne.s32.totalorder %s87, %s90
      %p96 = scmp.eq.s32.totalorder %s9, 0
      %p97 = por %p95, %p96
      %p98 = scmp.ne.s32.totalorder %s87, %s90
      %p99 = scmp.eq.s32.totalorder %s14, 2
      %p100 = por %p98, %p99
      %p101 = scmp.ne.s32.totalorder %s90, %s91
      %p102 = scmp.eq.s32.totalorder %s14, 0
      %p103 = por %p101, %p102
      %p104 = scmp.ne.s32.totalorder %s90, %s91
      %p105 = scmp.eq.s32.totalorder %s15, 2
      %p106 = por %p104, %p105
      %p108 = scmp.ne.s32.totalorder %s91, %s107
      %p109 = scmp.eq.s32.totalorder %s15, 0
      %p110 = por %p108, %p109
      %p111 = scmp.le.s32.totalorder 1, %s9
      %p112 = scmp.lt.s32.totalorder %s9, 4
      %p113 = pnand %p111, %p112
      %p114 = pneg %p113
      // Predicated region
      $region9: #{regional_cnn_forward.3} parent=5 // pred_check
        _
      $region10: #{regional_cnn_forward.3} parent=5 // pred_check_branch
        %116 = sbr.rel (%p113) target = $region12
      $region11: #{regional_cnn_forward.3} parent=5 // pred_region
        %s117 = ssub.s32 %s9, 1
        // Predicated region
        $region13: #{regional_cnn_forward.3} parent=11 // pred_check
          %p118 = pneg %p56
        $region14: #{regional_cnn_forward.3} parent=11 // pred_check_branch
          %120 = sbr.rel (%p118) target = $region16
        $region15: #{regional_cnn_forward.3} parent=11 // pred_region
          _
        $region16: #{regional_cnn_forward.3} parent=11 // pred_fallthru
          _
        // Predicated region
        $region17: #{regional_cnn_forward.3} parent=11 // pred_check
          %p121 = pneg %p77
        $region18: #{regional_cnn_forward.3} parent=11 // pred_check_branch
          %123 = sbr.rel (%p121) target = $region20
        $region19: #{regional_cnn_forward.3} parent=11 // pred_region
          _
        $region20: #{regional_cnn_forward.3} parent=11 // pred_fallthru
          _
      $region12: #{regional_cnn_forward.3} parent=5 // pred_fallthru
        _
      %p124 = scmp.lt.s32.totalorder %s9, 3
      // Predicated region
      $region21: #{regional_cnn_forward.3} parent=5 // pred_check
        %p125 = pneg %p124
      $region22: #{regional_cnn_forward.3} parent=5 // pred_check_branch
        %127 = sbr.rel (%p125) target = $region24
      $region23: #{regional_cnn_forward.3} parent=5 // pred_region
        // Predicated region
        $region25: #{regional_cnn_forward.3} parent=23 // pred_check
          %p128 = pneg %p29
        $region26: #{regional_cnn_forward.3} parent=23 // pred_check_branch
          %130 = sbr.rel (%p128) target = $region28
        $region27: #{regional_cnn_forward.3} parent=23 // pred_region
          %s131 = sand.u32 %s19, 1
          %s132 = sand.u32 %s19, 1
          %s133 = smul.addr %s132, 256
          %s134 = scalar_lea.vmem [#allocation2], %s133
          %s135 = smul.u32 4, %s9
          %s136 = smul.addr %s135, 8
          %s137 = scalar_lea.vmem %s0, %s136
          // Predicated region
          $region29: #{regional_cnn_forward.3} parent=27 // pred_check
            _
          $region30: #{regional_cnn_forward.3} parent=27 // pred_check_branch
            %139 = sbr.rel (0) target = $region32
          $region31: #{regional_cnn_forward.3} parent=27 // pred_region
            // Predicated region
            $region33: #{regional_cnn_forward.3} parent=31 // pred_check
              _
            $region34: #{regional_cnn_forward.3} parent=31 // pred_check_branch
              %141 = sbr.rel (0) target = $region36
            $region35: #{regional_cnn_forward.3} parent=31 // pred_region
              loop: start=0, step=1, limit=1
              $region37: #{regional_cnn_forward.3} parent=35 // loop_pre_header
                _
              $region38: #{regional_cnn_forward.3} parent=35 // loop_header
                %s143 = sphi 0, %s147
                %p144 = scmp.ge.s32.totalorder %s143, 1
                %s148 = sphi %s137, %s137
                %s149 = sphi %s134, %s134
              $region39: #{regional_cnn_forward.3} parent=35 // loop_header_branch
                %146 = sbr.rel (%p144) target = $region43
              $region40: #{regional_cnn_forward.3} parent=35 // loop_body
                %v150 = vld [vmem:[%s148] sm:$0xff]
                %151 = vst [vmem:[%s149] sm:$0xff] %v150
                %v152 = vld [vmem:[%s148 + $0x8] sm:$0xff]
                %153 = vst [vmem:[%s149 + $0x8] sm:$0xff] %v152
                %v154 = vld [vmem:[%s148 + $0x10] sm:$0xff]
                %155 = vst [vmem:[%s149 + $0x10] sm:$0xff] %v154
                %v156 = vld [vmem:[%s148 + $0x18] sm:$0xff]
                %157 = vst [vmem:[%s149 + $0x18] sm:$0xff] %v156
                %v158 = vld [vmem:[%s148 + $0x60] sm:$0xff]
                %159 = vst [vmem:[%s149 + $0x20] sm:$0xff] %v158
                %v160 = vld [vmem:[%s148 + $0x68] sm:$0xff]
                %161 = vst [vmem:[%s149 + $0x28] sm:$0xff] %v160
                %v162 = vld [vmem:[%s148 + $0x70] sm:$0xff]
                %163 = vst [vmem:[%s149 + $0x30] sm:$0xff] %v162
                %v164 = vld [vmem:[%s148 + $0x78] sm:$0xff]
                %165 = vst [vmem:[%s149 + $0x38] sm:$0xff] %v164
                %v166 = vld [vmem:[%s148 + $0xc0] sm:$0xff]
                %167 = vst [vmem:[%s149 + $0x40] sm:$0xff] %v166
                %v168 = vld [vmem:[%s148 + $0xc8] sm:$0xff]
                %169 = vst [vmem:[%s149 + $0x48] sm:$0xff] %v168
                %v170 = vld [vmem:[%s148 + $0xd0] sm:$0xff]
                %171 = vst [vmem:[%s149 + $0x50] sm:$0xff] %v170
                %v172 = vld [vmem:[%s148 + $0xd8] sm:$0xff]
                %173 = vst [vmem:[%s149 + $0x58] sm:$0xff] %v172
                %v174 = vld [vmem:[%s148 + $0x120] sm:$0xff]
                %175 = vst [vmem:[%s149 + $0x60] sm:$0xff] %v174
                %v176 = vld [vmem:[%s148 + $0x128] sm:$0xff]
                %177 = vst [vmem:[%s149 + $0x68] sm:$0xff] %v176
                %v178 = vld [vmem:[%s148 + $0x130] sm:$0xff]
                %179 = vst [vmem:[%s149 + $0x70] sm:$0xff] %v178
                %v180 = vld [vmem:[%s148 + $0x138] sm:$0xff]
                %181 = vst [vmem:[%s149 + $0x78] sm:$0xff] %v180
                %v182 = vld [vmem:[%s148 + $0x180] sm:$0xff]
                %183 = vst [vmem:[%s149 + $0x80] sm:$0xff] %v182
                %v184 = vld [vmem:[%s148 + $0x188] sm:$0xff]
                %185 = vst [vmem:[%s149 + $0x88] sm:$0xff] %v184
                %v186 = vld [vmem:[%s148 + $0x190] sm:$0xff]
                %187 = vst [vmem:[%s149 + $0x90] sm:$0xff] %v186
                %v188 = vld [vmem:[%s148 + $0x198] sm:$0xff]
                %189 = vst [vmem:[%s149 + $0x98] sm:$0xff] %v188
                %v190 = vld [vmem:[%s148 + $0x1e0] sm:$0xff]
                %191 = vst [vmem:[%s149 + $0xa0] sm:$0xff] %v190
                %v192 = vld [vmem:[%s148 + $0x1e8] sm:$0xff]
                %193 = vst [vmem:[%s149 + $0xa8] sm:$0xff] %v192
                %v194 = vld [vmem:[%s148 + $0x1f0] sm:$0xff]
                %195 = vst [vmem:[%s149 + $0xb0] sm:$0xff] %v194
                %v196 = vld [vmem:[%s148 + $0x1f8] sm:$0xff]
                %197 = vst [vmem:[%s149 + $0xb8] sm:$0xff] %v196
                %v198 = vld [vmem:[%s148 + $0x240] sm:$0xff]
                %199 = vst [vmem:[%s149 + $0xc0] sm:$0xff] %v198
                %v200 = vld [vmem:[%s148 + $0x248] sm:$0xff]
                %201 = vst [vmem:[%s149 + $0xc8] sm:$0xff] %v200
                %v202 = vld [vmem:[%s148 + $0x250] sm:$0xff]
                %203 = vst [vmem:[%s149 + $0xd0] sm:$0xff] %v202
                %v204 = vld [vmem:[%s148 + $0x258] sm:$0xff]
                %205 = vst [vmem:[%s149 + $0xd8] sm:$0xff] %v204
                %v206 = vld [vmem:[%s148 + $0x2a0] sm:$0xff]
                %207 = vst [vmem:[%s149 + $0xe0] sm:$0xff] %v206
                %v208 = vld [vmem:[%s148 + $0x2a8] sm:$0xff]
                %209 = vst [vmem:[%s149 + $0xe8] sm:$0xff] %v208
                %v210 = vld [vmem:[%s148 + $0x2b0] sm:$0xff]
                %211 = vst [vmem:[%s149 + $0xf0] sm:$0xff] %v210
                %v212 = vld [vmem:[%s148 + $0x2b8] sm:$0xff]
                %213 = vst [vmem:[%s149 + $0xf8] sm:$0xff] %v212
              $region41: #{regional_cnn_forward.3} parent=35 // loop_footer
                %s147 = sadd.s32 1, %s143
              $region42: #{regional_cnn_forward.3} parent=35 // loop_footer_branch
                %142 = sbr.rel target = $region38
              $region43: #{regional_cnn_forward.3} parent=35 // loop_exit
                _
            $region36: #{regional_cnn_forward.3} parent=31 // pred_fallthru
              _
            // Predicated region
            $region44: #{regional_cnn_forward.3} parent=31 // pred_check
              _
            $region45: #{regional_cnn_forward.3} parent=31 // pred_check_branch
              %215 = sbr.rel target = $region47
            $region46: #{regional_cnn_forward.3} parent=31 // pred_region
              _
            $region47: #{regional_cnn_forward.3} parent=31 // pred_fallthru
              _
          $region32: #{regional_cnn_forward.3} parent=27 // pred_fallthru
            _
          %216 = vnop
        $region28: #{regional_cnn_forward.3} parent=23 // pred_fallthru
          _
      $region24: #{regional_cnn_forward.3} parent=5 // pred_fallthru
        _
      %p217 = scmp.le.s32.totalorder 1, %s9
      %p218 = scmp.lt.s32.totalorder %s9, 4
      %p219 = pnand %p217, %p218
      %p220 = pneg %p219
      // Predicated region
      $region48: #{regional_cnn_forward.3} parent=5 // pred_check
        _
      $region49: #{regional_cnn_forward.3} parent=5 // pred_check_branch
        %222 = sbr.rel (%p219) target = $region51
      $region50: #{regional_cnn_forward.3} parent=5 // pred_region
        %s223 = ssub.s32 %s9, 1
        %s224 = sand.u32 %s22, 1
        %s225 = sand.u32 %s22, 1
        %s226 = smul.addr %s225, 256
        %s227 = scalar_lea.vmem [#allocation2], %s226
        // Predicated region
        $region52: #{regional_cnn_forward.3} parent=50 // pred_check
          %p228 = pneg %p35
        $region53: #{regional_cnn_forward.3} parent=50 // pred_check_branch
          %230 = sbr.rel (%p228) target = $region55
        $region54: #{regional_cnn_forward.3} parent=50 // pred_region
          _
        $region55: #{regional_cnn_forward.3} parent=50 // pred_fallthru
          _
        %s231 = sand.u32 %s22, 1
        %s232 = sand.u32 %s22, 1
        %s233 = smul.addr %s232, 256
        %s234 = scalar_lea.vmem [#allocation2], %s233
        %p235 = pneg %p35
        %p236 = pneg %p32
        %p237 = pneg %p56
        %p238 = pneg %p53
        %p239 = pneg %p77
        %p240 = pneg %p74
        %p241 = pneg %p103
        %p242 = pneg %p100
        %s243 = sand.u32 %s90, 1
        %s244 = sand.u32 %s90, 1
        %s245 = smul.addr %s244, 128
        %s246 = scalar_lea.vmem [#allocation3], %s245
        %s247 = smul.u32 4, %s14
        %s248 = smul.u32 4, %s14
        %v249 = vld [vmem:[%s1] sm:$0xff]
        %v250 = vld [vmem:[%s1 + $0x8] sm:$0xff]
        %v251 = vld [vmem:[%s1 + $0x10] sm:$0xff]
        %v252 = vld [vmem:[%s1 + $0x18] sm:$0xff]
        %v253 = vld [vmem:[%s227] sm:$0xff]
        %v254 = vld [vmem:[%s227 + $0x8] sm:$0xff]
        %v255 = vld [vmem:[%s227 + $0x10] sm:$0xff]
        %v256 = vld [vmem:[%s227 + $0x18] sm:$0xff]
        %v257 = vld [vmem:[%s227 + $0x20] sm:$0xff]
        %v258 = vld [vmem:[%s227 + $0x28] sm:$0xff]
        %v259 = vld [vmem:[%s227 + $0x30] sm:$0xff]
        %v260 = vld [vmem:[%s227 + $0x38] sm:$0xff]
        %vm261 = vcmask 130048
        %v263 = vsel %vm261, %v249, 0
        %v266 = vsel %vm261, %v250, 0
        %v269 = vsel %vm261, %v251, 0
        %v272 = vsel %vm261, %v252, 0
        %274 = vmatprep.subr.mxu0 0.0
        %275 = vmatpush1.msra.mxu0 0.0
        %276 = vmatprep.subr.mxu0 0.0
        %277 = vmatpush1.msra.mxu0 0.0
        %278 = vmatprep.subr.mxu0 0.0
        %279 = vmatpush1.msra.mxu0 0.0
        %280 = vmatprep.subr.mxu0 0.0
        %281 = vmatpush1.msra.mxu0 0.0
        %282 = vmatprep.subr.mxu0 0.0
        %283 = vmatpush1.msra.mxu0 0.0
        %284 = vmatprep.subr.mxu0 0.0
        %285 = vmatpush1.msra.mxu0 0.0
        %286 = vmatprep.subr.mxu0 0.0
        %287 = vmatpush1.msra.mxu0 0.0
        %288 = vmatprep.subr.mxu0 0.0
        %289 = vmatpush1.msra.mxu0 0.0
        %290 = vmatprep.subr.mxu0 0.0
        %291 = vmatpush1.msra.mxu0 0.0
        %292 = vmatprep.subr.mxu0 0.0
        %293 = vmatpush1.msra.mxu0 0.0
        %294 = vmatprep.subr.mxu0 0.0
        %295 = vmatpush1.msra.mxu0 0.0
        %296 = vmatprep.subr.mxu0 0.0
        %297 = vmatpush1.msra.mxu0 0.0
        %298 = vmatprep.subr.mxu0 0.0
        %299 = vmatpush1.msra.mxu0 0.0
        %300 = vmatprep.subr.mxu0 0.0
        %301 = vmatpush1.msra.mxu0 0.0
        %302 = vmatprep.subr.mxu0 %v258
        %303 = vmatpush1.msra.mxu0 %v257
        %304 = vmatprep.subr.mxu0 %v254
        %305 = vmatpush1.msra.mxu0 %v253
        %306 = vmatprep.subr.mxu0 0.0
        %307 = vmatpush2.msra.mxu0 0.0
        %308 = vmatprep.subr.mxu0 0.0
        %309 = vmatpush2.msra.mxu0 0.0
        %310 = vmatprep.subr.mxu0 0.0
        %311 = vmatpush2.msra.mxu0 0.0
        %312 = vmatprep.subr.mxu0 0.0
        %313 = vmatpush2.msra.mxu0 0.0
        %314 = vmatprep.subr.mxu0 0.0
        %315 = vmatpush2.msra.mxu0 0.0
        %316 = vmatprep.subr.mxu0 0.0
        %317 = vmatpush2.msra.mxu0 0.0
        %318 = vmatprep.subr.mxu0 0.0
        %319 = vmatpush2.msra.mxu0 0.0
        %320 = vmatprep.subr.mxu0 0.0
        %321 = vmatpush2.msra.mxu0 0.0
        %322 = vmatprep.subr.mxu0 0.0
        %323 = vmatpush2.msra.mxu0 0.0
        %324 = vmatprep.subr.mxu0 0.0
        %325 = vmatpush2.msra.mxu0 0.0
        %326 = vmatprep.subr.mxu0 0.0
        %327 = vmatpush2.msra.mxu0 0.0
        %328 = vmatprep.subr.mxu0 0.0
        %329 = vmatpush2.msra.mxu0 0.0
        %330 = vmatprep.subr.mxu0 0.0
        %331 = vmatpush2.msra.mxu0 0.0
        %332 = vmatprep.subr.mxu0 0.0
        %333 = vmatpush2.msra.mxu0 0.0
        %334 = vmatprep.subr.mxu0 0.0
        %335 = vmatpush2.msra.mxu0 0.0
        %336 = vmatprep.subr.mxu0 0.0
        %337 = vmatpush2.msra.mxu0 0.0
        %338 = vmatprep.mubr.f32.mxu0 0.0
        %339 = vmatmul.mubr.f32.gmra.mxu0 %v263
        %v340 = vpop.f32.mrf.mxu0
        %v341 = vadd.f32 0.0, %v340
        %v342 = vpop.f32.mrf.mxu0
        %v343 = vadd.f32 0.0, %v342
        %344 = vmatprep.mubr.f32.mxu0 0.0
        %345 = vmatmul.mubr.f32.gmra.mxu0 %v266
        %v346 = vpop.f32.mrf.mxu0
        %v347 = vadd.f32 0.0, %v346
        %v348 = vpop.f32.mrf.mxu0
        %v349 = vadd.f32 0.0, %v348
        %350 = vmatprep.mubr.f32.mxu0 0.0
        %351 = vmatmul.mubr.f32.gmra.mxu0 %v269
        %v352 = vpop.f32.mrf.mxu0
        %v353 = vadd.f32 0.0, %v352
        %v354 = vpop.f32.mrf.mxu0
        %v355 = vadd.f32 0.0, %v354
        %356 = vmatprep.mubr.f32.mxu0 0.0
        %357 = vmatmul.mubr.f32.gmra.mxu0 %v272
        %v358 = vpop.f32.mrf.mxu0
        %v359 = vadd.f32 0.0, %v358
        %v360 = vpop.f32.mrf.mxu0
        %v361 = vadd.f32 0.0, %v360
        %362 = vdwg.mxu0
        %363 = vmatprep.subr.mxu0 0.0
        %364 = vmatpush1.msra.mxu0 0.0
        %365 = vmatprep.subr.mxu0 0.0
        %366 = vmatpush1.msra.mxu0 0.0
        %367 = vmatprep.subr.mxu0 0.0
        %368 = vmatpush1.msra.mxu0 0.0
        %369 = vmatprep.subr.mxu0 0.0
        %370 = vmatpush1.msra.mxu0 0.0
        %371 = vmatprep.subr.mxu0 0.0
        %372 = vmatpush1.msra.mxu0 0.0
        %373 = vmatprep.subr.mxu0 0.0
        %374 = vmatpush1.msra.mxu0 0.0
        %375 = vmatprep.subr.mxu0 0.0
        %376 = vmatpush1.msra.mxu0 0.0
        %377 = vmatprep.subr.mxu0 0.0
        %378 = vmatpush1.msra.mxu0 0.0
        %379 = vmatprep.subr.mxu0 0.0
        %380 = vmatpush1.msra.mxu0 0.0
        %381 = vmatprep.subr.mxu0 0.0
        %382 = vmatpush1.msra.mxu0 0.0
        %383 = vmatprep.subr.mxu0 0.0
        %384 = vmatpush1.msra.mxu0 0.0
        %385 = vmatprep.subr.mxu0 0.0
        %386 = vmatpush1.msra.mxu0 0.0
        %387 = vmatprep.subr.mxu0 0.0
        %388 = vmatpush1.msra.mxu0 0.0
        %389 = vmatprep.subr.mxu0 0.0
        %390 = vmatpush1.msra.mxu0 0.0
        %391 = vmatprep.subr.mxu0 %v260
        %392 = vmatpush1.msra.mxu0 %v259
        %393 = vmatprep.subr.mxu0 %v256
        %394 = vmatpush1.msra.mxu0 %v255
        %395 = vmatprep.subr.mxu0 0.0
        %396 = vmatpush2.msra.mxu0 0.0
        %397 = vmatprep.subr.mxu0 0.0
        %398 = vmatpush2.msra.mxu0 0.0
        %399 = vmatprep.subr.mxu0 0.0
        %400 = vmatpush2.msra.mxu0 0.0
        %401 = vmatprep.subr.mxu0 0.0
        %402 = vmatpush2.msra.mxu0 0.0
        %403 = vmatprep.subr.mxu0 0.0
        %404 = vmatpush2.msra.mxu0 0.0
        %405 = vmatprep.subr.mxu0 0.0
        %406 = vmatpush2.msra.mxu0 0.0
        %407 = vmatprep.subr.mxu0 0.0
        %408 = vmatpush2.msra.mxu0 0.0
        %409 = vmatprep.subr.mxu0 0.0
        %410 = vmatpush2.msra.mxu0 0.0
        %411 = vmatprep.subr.mxu0 0.0
        %412 = vmatpush2.msra.mxu0 0.0
        %413 = vmatprep.subr.mxu0 0.0
        %414 = vmatpush2.msra.mxu0 0.0
        %415 = vmatprep.subr.mxu0 0.0
        %416 = vmatpush2.msra.mxu0 0.0
        %417 = vmatprep.subr.mxu0 0.0
        %418 = vmatpush2.msra.mxu0 0.0
        %419 = vmatprep.subr.mxu0 0.0
        %420 = vmatpush2.msra.mxu0 0.0
        %421 = vmatprep.subr.mxu0 0.0
        %422 = vmatpush2.msra.mxu0 0.0
        %423 = vmatprep.subr.mxu0 0.0
        %424 = vmatpush2.msra.mxu0 0.0
        %425 = vmatprep.subr.mxu0 0.0
        %426 = vmatpush2.msra.mxu0 0.0
        %427 = vmatprep.mubr.f32.mxu0 0.0
        %428 = vmatmul.mubr.f32.gmra.mxu0 %v263
        %v429 = vpop.f32.mrf.mxu0
        %v430 = vadd.f32 0.0, %v429
        %v431 = vpop.f32.mrf.mxu0
        %v432 = vadd.f32 0.0, %v431
        %433 = vmatprep.mubr.f32.mxu0 0.0
        %434 = vmatmul.mubr.f32.gmra.mxu0 %v266
        %v435 = vpop.f32.mrf.mxu0
        %v436 = vadd.f32 0.0, %v435
        %v437 = vpop.f32.mrf.mxu0
        %v438 = vadd.f32 0.0, %v437
        %439 = vmatprep.mubr.f32.mxu0 0.0
        %440 = vmatmul.mubr.f32.gmra.mxu0 %v269
        %v441 = vpop.f32.mrf.mxu0
        %v442 = vadd.f32 0.0, %v441
        %v443 = vpop.f32.mrf.mxu0
        %v444 = vadd.f32 0.0, %v443
        %445 = vmatprep.mubr.f32.mxu0 0.0
        %446 = vmatmul.mubr.f32.gmra.mxu0 %v272
        %v447 = vpop.f32.mrf.mxu0
        %v448 = vadd.f32 0.0, %v447
        %v449 = vpop.f32.mrf.mxu0
        %v450 = vadd.f32 0.0, %v449
        %451 = vdwg.mxu0
        %s452 = scalar_lea.vmem %s227, 64 [#allocation2]
        %v453 = vld [vmem:[%s452] sm:$0xff]
        %v454 = vld [vmem:[%s452 + $0x8] sm:$0xff]
        %v455 = vld [vmem:[%s452 + $0x10] sm:$0xff]
        %v456 = vld [vmem:[%s452 + $0x18] sm:$0xff]
        %v457 = vld [vmem:[%s452 + $0x20] sm:$0xff]
        %v458 = vld [vmem:[%s452 + $0x28] sm:$0xff]
        %v459 = vld [vmem:[%s452 + $0x30] sm:$0xff]
        %v460 = vld [vmem:[%s452 + $0x38] sm:$0xff]
        %461 = vmatprep.subr.mxu0 0.0
        %462 = vmatpush1.msra.mxu0 0.0
        %463 = vmatprep.subr.mxu0 0.0
        %464 = vmatpush1.msra.mxu0 0.0
        %465 = vmatprep.subr.mxu0 0.0
        %466 = vmatpush1.msra.mxu0 0.0
        %467 = vmatprep.subr.mxu0 0.0
        %468 = vmatpush1.msra.mxu0 0.0
        %469 = vmatprep.subr.mxu0 0.0
        %470 = vmatpush1.msra.mxu0 0.0
        %471 = vmatprep.subr.mxu0 0.0
        %472 = vmatpush1.msra.mxu0 0.0
        %473 = vmatprep.subr.mxu0 0.0
        %474 = vmatpush1.msra.mxu0 0.0
        %475 = vmatprep.subr.mxu0 0.0
        %476 = vmatpush1.msra.mxu0 0.0
        %477 = vmatprep.subr.mxu0 0.0
        %478 = vmatpush1.msra.mxu0 0.0
        %479 = vmatprep.subr.mxu0 0.0
        %480 = vmatpush1.msra.mxu0 0.0
        %481 = vmatprep.subr.mxu0 0.0
        %482 = vmatpush1.msra.mxu0 0.0
        %483 = vmatprep.subr.mxu0 0.0
        %484 = vmatpush1.msra.mxu0 0.0
        %485 = vmatprep.subr.mxu0 0.0
        %486 = vmatpush1.msra.mxu0 0.0
        %487 = vmatprep.subr.mxu0 0.0
        %488 = vmatpush1.msra.mxu0 0.0
        %489 = vmatprep.subr.mxu0 %v458
        %490 = vmatpush1.msra.mxu0 %v457
        %491 = vmatprep.subr.mxu0 %v454
        %492 = vmatpush1.msra.mxu0 %v453
        %493 = vmatprep.subr.mxu0 0.0
        %494 = vmatpush2.msra.mxu0 0.0
        %495 = vmatprep.subr.mxu0 0.0
        %496 = vmatpush2.msra.mxu0 0.0
        %497 = vmatprep.subr.mxu0 0.0
        %498 = vmatpush2.msra.mxu0 0.0
        %499 = vmatprep.subr.mxu0 0.0
        %500 = vmatpush2.msra.mxu0 0.0
        %501 = vmatprep.subr.mxu0 0.0
        %502 = vmatpush2.msra.mxu0 0.0
        %503 = vmatprep.subr.mxu0 0.0
        %504 = vmatpush2.msra.mxu0 0.0
        %505 = vmatprep.subr.mxu0 0.0
        %506 = vmatpush2.msra.mxu0 0.0
        %507 = vmatprep.subr.mxu0 0.0
        %508 = vmatpush2.msra.mxu0 0.0
        %509 = vmatprep.subr.mxu0 0.0
        %510 = vmatpush2.msra.mxu0 0.0
        %511 = vmatprep.subr.mxu0 0.0
        %512 = vmatpush2.msra.mxu0 0.0
        %513 = vmatprep.subr.mxu0 0.0
        %514 = vmatpush2.msra.mxu0 0.0
        %515 = vmatprep.subr.mxu0 0.0
        %516 = vmatpush2.msra.mxu0 0.0
        %517 = vmatprep.subr.mxu0 0.0
        %518 = vmatpush2.msra.mxu0 0.0
        %519 = vmatprep.subr.mxu0 0.0
        %520 = vmatpush2.msra.mxu0 0.0
        %521 = vmatprep.subr.mxu0 0.0
        %522 = vmatpush2.msra.mxu0 0.0
        %523 = vmatprep.subr.mxu0 0.0
        %524 = vmatpush2.msra.mxu0 0.0
        %525 = vmatprep.mubr.f32.mxu0 0.0
        %526 = vmatmul.mubr.f32.gmra.mxu0 %v263
        %v527 = vpop.f32.mrf.mxu0
        %v528 = vadd.f32 0.0, %v527
        %v529 = vpop.f32.mrf.mxu0
        %v530 = vadd.f32 0.0, %v529
        %531 = vmatprep.mubr.f32.mxu0 0.0
        %532 = vmatmul.mubr.f32.gmra.mxu0 %v266
        %v533 = vpop.f32.mrf.mxu0
        %v534 = vadd.f32 0.0, %v533
        %v535 = vpop.f32.mrf.mxu0
        %v536 = vadd.f32 0.0, %v535
        %537 = vmatprep.mubr.f32.mxu0 0.0
        %538 = vmatmul.mubr.f32.gmra.mxu0 %v269
        %v539 = vpop.f32.mrf.mxu0
        %v540 = vadd.f32 0.0, %v539
        %v541 = vpop.f32.mrf.mxu0
        %v542 = vadd.f32 0.0, %v541
        %543 = vmatprep.mubr.f32.mxu0 0.0
        %544 = vmatmul.mubr.f32.gmra.mxu0 %v272
        %v545 = vpop.f32.mrf.mxu0
        %v546 = vadd.f32 0.0, %v545
        %v547 = vpop.f32.mrf.mxu0
        %v548 = vadd.f32 0.0, %v547
        %549 = vdwg.mxu0
        %550 = vmatprep.subr.mxu0 0.0
        %551 = vmatpush1.msra.mxu0 0.0
        %552 = vmatprep.subr.mxu0 0.0
        %553 = vmatpush1.msra.mxu0 0.0
        %554 = vmatprep.subr.mxu0 0.0
        %555 = vmatpush1.msra.mxu0 0.0
        %556 = vmatprep.subr.mxu0 0.0
        %557 = vmatpush1.msra.mxu0 0.0
        %558 = vmatprep.subr.mxu0 0.0
        %559 = vmatpush1.msra.mxu0 0.0
        %560 = vmatprep.subr.mxu0 0.0
        %561 = vmatpush1.msra.mxu0 0.0
        %562 = vmatprep.subr.mxu0 0.0
        %563 = vmatpush1.msra.mxu0 0.0
        %564 = vmatprep.subr.mxu0 0.0
        %565 = vmatpush1.msra.mxu0 0.0
        %566 = vmatprep.subr.mxu0 0.0
        %567 = vmatpush1.msra.mxu0 0.0
        %568 = vmatprep.subr.mxu0 0.0
        %569 = vmatpush1.msra.mxu0 0.0
        %570 = vmatprep.subr.mxu0 0.0
        %571 = vmatpush1.msra.mxu0 0.0
        %572 = vmatprep.subr.mxu0 0.0
        %573 = vmatpush1.msra.mxu0 0.0
        %574 = vmatprep.subr.mxu0 0.0
        %575 = vmatpush1.msra.mxu0 0.0
        %576 = vmatprep.subr.mxu0 0.0
        %577 = vmatpush1.msra.mxu0 0.0
        %578 = vmatprep.subr.mxu0 %v460
        %579 = vmatpush1.msra.mxu0 %v459
        %580 = vmatprep.subr.mxu0 %v456
        %581 = vmatpush1.msra.mxu0 %v455
        %582 = vmatprep.subr.mxu0 0.0
        %583 = vmatpush2.msra.mxu0 0.0
        %584 = vmatprep.subr.mxu0 0.0
        %585 = vmatpush2.msra.mxu0 0.0
        %586 = vmatprep.subr.mxu0 0.0
        %587 = vmatpush2.msra.mxu0 0.0
        %588 = vmatprep.subr.mxu0 0.0
        %589 = vmatpush2.msra.mxu0 0.0
        %590 = vmatprep.subr.mxu0 0.0
        %591 = vmatpush2.msra.mxu0 0.0
        %592 = vmatprep.subr.mxu0 0.0
        %593 = vmatpush2.msra.mxu0 0.0
        %594 = vmatprep.subr.mxu0 0.0
        %595 = vmatpush2.msra.mxu0 0.0
        %596 = vmatprep.subr.mxu0 0.0
        %597 = vmatpush2.msra.mxu0 0.0
        %598 = vmatprep.subr.mxu0 0.0
        %599 = vmatpush2.msra.mxu0 0.0
        %600 = vmatprep.subr.mxu0 0.0
        %601 = vmatpush2.msra.mxu0 0.0
        %602 = vmatprep.subr.mxu0 0.0
        %603 = vmatpush2.msra.mxu0 0.0
        %604 = vmatprep.subr.mxu0 0.0
        %605 = vmatpush2.msra.mxu0 0.0
        %606 = vmatprep.subr.mxu0 0.0
        %607 = vmatpush2.msra.mxu0 0.0
        %608 = vmatprep.subr.mxu0 0.0
        %609 = vmatpush2.msra.mxu0 0.0
        %610 = vmatprep.subr.mxu0 0.0
        %611 = vmatpush2.msra.mxu0 0.0
        %612 = vmatprep.subr.mxu0 0.0
        %613 = vmatpush2.msra.mxu0 0.0
        %614 = vmatprep.mubr.f32.mxu0 0.0
        %615 = vmatmul.mubr.f32.gmra.mxu0 %v263
        %v616 = vpop.f32.mrf.mxu0
        %v617 = vadd.f32 0.0, %v616
        %v618 = vpop.f32.mrf.mxu0
        %v619 = vadd.f32 0.0, %v618
        %620 = vmatprep.mubr.f32.mxu0 0.0
        %621 = vmatmul.mubr.f32.gmra.mxu0 %v266
        %v622 = vpop.f32.mrf.mxu0
        %v623 = vadd.f32 0.0, %v622
        %v624 = vpop.f32.mrf.mxu0
        %v625 = vadd.f32 0.0, %v624
        %626 = vmatprep.mubr.f32.mxu0 0.0
        %627 = vmatmul.mubr.f32.gmra.mxu0 %v269
        %v628 = vpop.f32.mrf.mxu0
        %v629 = vadd.f32 0.0, %v628
        %v630 = vpop.f32.mrf.mxu0
        %v631 = vadd.f32 0.0, %v630
        %632 = vmatprep.mubr.f32.mxu0 0.0
        %633 = vmatmul.mubr.f32.gmra.mxu0 %v272
        %v634 = vpop.f32.mrf.mxu0
        %v635 = vadd.f32 0.0, %v634
        %v636 = vpop.f32.mrf.mxu0
        %v637 = vadd.f32 0.0, %v636
        %638 = vdwg.mxu0
        %s639 = scalar_lea.vmem %s227, 128 [#allocation2]
        %v640 = vld [vmem:[%s639] sm:$0xff]
        %v641 = vld [vmem:[%s639 + $0x8] sm:$0xff]
        %v642 = vld [vmem:[%s639 + $0x10] sm:$0xff]
        %v643 = vld [vmem:[%s639 + $0x18] sm:$0xff]
        %v644 = vld [vmem:[%s639 + $0x20] sm:$0xff]
        %v645 = vld [vmem:[%s639 + $0x28] sm:$0xff]
        %v646 = vld [vmem:[%s639 + $0x30] sm:$0xff]
        %v647 = vld [vmem:[%s639 + $0x38] sm:$0xff]
        %648 = vmatprep.subr.mxu0 0.0
        %649 = vmatpush1.msra.mxu0 0.0
        %650 = vmatprep.subr.mxu0 0.0
        %651 = vmatpush1.msra.mxu0 0.0
        %652 = vmatprep.subr.mxu0 0.0
        %653 = vmatpush1.msra.mxu0 0.0
        %654 = vmatprep.subr.mxu0 0.0
        %655 = vmatpush1.msra.mxu0 0.0
        %656 = vmatprep.subr.mxu0 0.0
        %657 = vmatpush1.msra.mxu0 0.0
        %658 = vmatprep.subr.mxu0 0.0
        %659 = vmatpush1.msra.mxu0 0.0
        %660 = vmatprep.subr.mxu0 0.0
        %661 = vmatpush1.msra.mxu0 0.0
        %662 = vmatprep.subr.mxu0 0.0
        %663 = vmatpush1.msra.mxu0 0.0
        %664 = vmatprep.subr.mxu0 0.0
        %665 = vmatpush1.msra.mxu0 0.0
        %666 = vmatprep.subr.mxu0 0.0
        %667 = vmatpush1.msra.mxu0 0.0
        %668 = vmatprep.subr.mxu0 0.0
        %669 = vmatpush1.msra.mxu0 0.0
        %670 = vmatprep.subr.mxu0 0.0
        %671 = vmatpush1.msra.mxu0 0.0
        %672 = vmatprep.subr.mxu0 0.0
        %673 = vmatpush1.msra.mxu0 0.0
        %674 = vmatprep.subr.mxu0 0.0
        %675 = vmatpush1.msra.mxu0 0.0
        %676 = vmatprep.subr.mxu0 %v645
        %677 = vmatpush1.msra.mxu0 %v644
        %678 = vmatprep.subr.mxu0 %v641
        %679 = vmatpush1.msra.mxu0 %v640
        %680 = vmatprep.subr.mxu0 0.0
        %681 = vmatpush2.msra.mxu0 0.0
        %682 = vmatprep.subr.mxu0 0.0
        %683 = vmatpush2.msra.mxu0 0.0
        %684 = vmatprep.subr.mxu0 0.0
        %685 = vmatpush2.msra.mxu0 0.0
        %686 = vmatprep.subr.mxu0 0.0
        %687 = vmatpush2.msra.mxu0 0.0
        %688 = vmatprep.subr.mxu0 0.0
        %689 = vmatpush2.msra.mxu0 0.0
        %690 = vmatprep.subr.mxu0 0.0
        %691 = vmatpush2.msra.mxu0 0.0
        %692 = vmatprep.subr.mxu0 0.0
        %693 = vmatpush2.msra.mxu0 0.0
        %694 = vmatprep.subr.mxu0 0.0
        %695 = vmatpush2.msra.mxu0 0.0
        %696 = vmatprep.subr.mxu0 0.0
        %697 = vmatpush2.msra.mxu0 0.0
        %698 = vmatprep.subr.mxu0 0.0
        %699 = vmatpush2.msra.mxu0 0.0
        %700 = vmatprep.subr.mxu0 0.0
        %701 = vmatpush2.msra.mxu0 0.0
        %702 = vmatprep.subr.mxu0 0.0
        %703 = vmatpush2.msra.mxu0 0.0
        %704 = vmatprep.subr.mxu0 0.0
        %705 = vmatpush2.msra.mxu0 0.0
        %706 = vmatprep.subr.mxu0 0.0
        %707 = vmatpush2.msra.mxu0 0.0
        %708 = vmatprep.subr.mxu0 0.0
        %709 = vmatpush2.msra.mxu0 0.0
        %710 = vmatprep.subr.mxu0 0.0
        %711 = vmatpush2.msra.mxu0 0.0
        %712 = vmatprep.mubr.f32.mxu0 0.0
        %713 = vmatmul.mubr.f32.gmra.mxu0 %v263
        %v714 = vpop.f32.mrf.mxu0
        %v715 = vadd.f32 0.0, %v714
        %v716 = vpop.f32.mrf.mxu0
        %v717 = vadd.f32 0.0, %v716
        %718 = vmatprep.mubr.f32.mxu0 0.0
        %719 = vmatmul.mubr.f32.gmra.mxu0 %v266
        %v720 = vpop.f32.mrf.mxu0
        %v721 = vadd.f32 0.0, %v720
        %v722 = vpop.f32.mrf.mxu0
        %v723 = vadd.f32 0.0, %v722
        %724 = vmatprep.mubr.f32.mxu0 0.0
        %725 = vmatmul.mubr.f32.gmra.mxu0 %v269
        %v726 = vpop.f32.mrf.mxu0
        %v727 = vadd.f32 0.0, %v726
        %v728 = vpop.f32.mrf.mxu0
        %v729 = vadd.f32 0.0, %v728
        %730 = vmatprep.mubr.f32.mxu0 0.0
        %731 = vmatmul.mubr.f32.gmra.mxu0 %v272
        %v732 = vpop.f32.mrf.mxu0
        %v733 = vadd.f32 0.0, %v732
        %v734 = vpop.f32.mrf.mxu0
        %v735 = vadd.f32 0.0, %v734
        %736 = vdwg.mxu0
        %737 = vmatprep.subr.mxu0 0.0
        %738 = vmatpush1.msra.mxu0 0.0
        %739 = vmatprep.subr.mxu0 0.0
        %740 = vmatpush1.msra.mxu0 0.0
        %741 = vmatprep.subr.mxu0 0.0
        %742 = vmatpush1.msra.mxu0 0.0
        %743 = vmatprep.subr.mxu0 0.0
        %744 = vmatpush1.msra.mxu0 0.0
        %745 = vmatprep.subr.mxu0 0.0
        %746 = vmatpush1.msra.mxu0 0.0
        %747 = vmatprep.subr.mxu0 0.0
        %748 = vmatpush1.msra.mxu0 0.0
        %749 = vmatprep.subr.mxu0 0.0
        %750 = vmatpush1.msra.mxu0 0.0
        %751 = vmatprep.subr.mxu0 0.0
        %752 = vmatpush1.msra.mxu0 0.0
        %753 = vmatprep.subr.mxu0 0.0
        %754 = vmatpush1.msra.mxu0 0.0
        %755 = vmatprep.subr.mxu0 0.0
        %756 = vmatpush1.msra.mxu0 0.0
        %757 = vmatprep.subr.mxu0 0.0
        %758 = vmatpush1.msra.mxu0 0.0
        %759 = vmatprep.subr.mxu0 0.0
        %760 = vmatpush1.msra.mxu0 0.0
        %761 = vmatprep.subr.mxu0 0.0
        %762 = vmatpush1.msra.mxu0 0.0
        %763 = vmatprep.subr.mxu0 0.0
        %764 = vmatpush1.msra.mxu0 0.0
        %765 = vmatprep.subr.mxu0 %v647
        %766 = vmatpush1.msra.mxu0 %v646
        %767 = vmatprep.subr.mxu0 %v643
        %768 = vmatpush1.msra.mxu0 %v642
        %769 = vmatprep.subr.mxu0 0.0
        %770 = vmatpush2.msra.mxu0 0.0
        %771 = vmatprep.subr.mxu0 0.0
        %772 = vmatpush2.msra.mxu0 0.0
        %773 = vmatprep.subr.mxu0 0.0
        %774 = vmatpush2.msra.mxu0 0.0
        %775 = vmatprep.subr.mxu0 0.0
        %776 = vmatpush2.msra.mxu0 0.0
        %777 = vmatprep.subr.mxu0 0.0
        %778 = vmatpush2.msra.mxu0 0.0
        %779 = vmatprep.subr.mxu0 0.0
        %780 = vmatpush2.msra.mxu0 0.0
        %781 = vmatprep.subr.mxu0 0.0
        %782 = vmatpush2.msra.mxu0 0.0
        %783 = vmatprep.subr.mxu0 0.0
        %784 = vmatpush2.msra.mxu0 0.0
        %785 = vmatprep.subr.mxu0 0.0
        %786 = vmatpush2.msra.mxu0 0.0
        %787 = vmatprep.subr.mxu0 0.0
        %788 = vmatpush2.msra.mxu0 0.0
        %789 = vmatprep.subr.mxu0 0.0
        %790 = vmatpush2.msra.mxu0 0.0
        %791 = vmatprep.subr.mxu0 0.0
        %792 = vmatpush2.msra.mxu0 0.0
        %793 = vmatprep.subr.mxu0 0.0
        %794 = vmatpush2.msra.mxu0 0.0
        %795 = vmatprep.subr.mxu0 0.0
        %796 = vmatpush2.msra.mxu0 0.0
        %797 = vmatprep.subr.mxu0 0.0
        %798 = vmatpush2.msra.mxu0 0.0
        %799 = vmatprep.subr.mxu0 0.0
        %800 = vmatpush2.msra.mxu0 0.0
        %801 = vmatprep.mubr.f32.mxu0 0.0
        %802 = vmatmul.mubr.f32.gmra.mxu0 %v263
        %v803 = vpop.f32.mrf.mxu0
        %v804 = vadd.f32 0.0, %v803
        %v805 = vpop.f32.mrf.mxu0
        %v806 = vadd.f32 0.0, %v805
        %807 = vmatprep.mubr.f32.mxu0 0.0
        %808 = vmatmul.mubr.f32.gmra.mxu0 %v266
        %v809 = vpop.f32.mrf.mxu0
        %v810 = vadd.f32 0.0, %v809
        %v811 = vpop.f32.mrf.mxu0
        %v812 = vadd.f32 0.0, %v811
        %813 = vmatprep.mubr.f32.mxu0 0.0
        %814 = vmatmul.mubr.f32.gmra.mxu0 %v269
        %v815 = vpop.f32.mrf.mxu0
        %v816 = vadd.f32 0.0, %v815
        %v817 = vpop.f32.mrf.mxu0
        %v818 = vadd.f32 0.0, %v817
        %819 = vmatprep.mubr.f32.mxu0 0.0
        %820 = vmatmul.mubr.f32.gmra.mxu0 %v272
        %v821 = vpop.f32.mrf.mxu0
        %v822 = vadd.f32 0.0, %v821
        %v823 = vpop.f32.mrf.mxu0
        %v824 = vadd.f32 0.0, %v823
        %825 = vdwg.mxu0
        %s826 = scalar_lea.vmem %s227, 192 [#allocation2]
        %v827 = vld [vmem:[%s826] sm:$0xff]
        %v828 = vld [vmem:[%s826 + $0x8] sm:$0xff]
        %v829 = vld [vmem:[%s826 + $0x10] sm:$0xff]
        %v830 = vld [vmem:[%s826 + $0x18] sm:$0xff]
        %v831 = vld [vmem:[%s826 + $0x20] sm:$0xff]
        %v832 = vld [vmem:[%s826 + $0x28] sm:$0xff]
        %v833 = vld [vmem:[%s826 + $0x30] sm:$0xff]
        %v834 = vld [vmem:[%s826 + $0x38] sm:$0xff]
        %835 = vmatprep.subr.mxu0 0.0
        %836 = vmatpush1.msra.mxu0 0.0
        %837 = vmatprep.subr.mxu0 0.0
        %838 = vmatpush1.msra.mxu0 0.0
        %839 = vmatprep.subr.mxu0 0.0
        %840 = vmatpush1.msra.mxu0 0.0
        %841 = vmatprep.subr.mxu0 0.0
        %842 = vmatpush1.msra.mxu0 0.0
        %843 = vmatprep.subr.mxu0 0.0
        %844 = vmatpush1.msra.mxu0 0.0
        %845 = vmatprep.subr.mxu0 0.0
        %846 = vmatpush1.msra.mxu0 0.0
        %847 = vmatprep.subr.mxu0 0.0
        %848 = vmatpush1.msra.mxu0 0.0
        %849 = vmatprep.subr.mxu0 0.0
        %850 = vmatpush1.msra.mxu0 0.0
        %851 = vmatprep.subr.mxu0 0.0
        %852 = vmatpush1.msra.mxu0 0.0
        %853 = vmatprep.subr.mxu0 0.0
        %854 = vmatpush1.msra.mxu0 0.0
        %855 = vmatprep.subr.mxu0 0.0
        %856 = vmatpush1.msra.mxu0 0.0
        %857 = vmatprep.subr.mxu0 0.0
        %858 = vmatpush1.msra.mxu0 0.0
        %859 = vmatprep.subr.mxu0 0.0
        %860 = vmatpush1.msra.mxu0 0.0
        %861 = vmatprep.subr.mxu0 0.0
        %862 = vmatpush1.msra.mxu0 0.0
        %863 = vmatprep.subr.mxu0 %v832
        %864 = vmatpush1.msra.mxu0 %v831
        %865 = vmatprep.subr.mxu0 %v828
        %866 = vmatpush1.msra.mxu0 %v827
        %867 = vmatprep.subr.mxu0 0.0
        %868 = vmatpush2.msra.mxu0 0.0
        %869 = vmatprep.subr.mxu0 0.0
        %870 = vmatpush2.msra.mxu0 0.0
        %871 = vmatprep.subr.mxu0 0.0
        %872 = vmatpush2.msra.mxu0 0.0
        %873 = vmatprep.subr.mxu0 0.0
        %874 = vmatpush2.msra.mxu0 0.0
        %875 = vmatprep.subr.mxu0 0.0
        %876 = vmatpush2.msra.mxu0 0.0
        %877 = vmatprep.subr.mxu0 0.0
        %878 = vmatpush2.msra.mxu0 0.0
        %879 = vmatprep.subr.mxu0 0.0
        %880 = vmatpush2.msra.mxu0 0.0
        %881 = vmatprep.subr.mxu0 0.0
        %882 = vmatpush2.msra.mxu0 0.0
        %883 = vmatprep.subr.mxu0 0.0
        %884 = vmatpush2.msra.mxu0 0.0
        %885 = vmatprep.subr.mxu0 0.0
        %886 = vmatpush2.msra.mxu0 0.0
        %887 = vmatprep.subr.mxu0 0.0
        %888 = vmatpush2.msra.mxu0 0.0
        %889 = vmatprep.subr.mxu0 0.0
        %890 = vmatpush2.msra.mxu0 0.0
        %891 = vmatprep.subr.mxu0 0.0
        %892 = vmatpush2.msra.mxu0 0.0
        %893 = vmatprep.subr.mxu0 0.0
        %894 = vmatpush2.msra.mxu0 0.0
        %895 = vmatprep.subr.mxu0 0.0
        %896 = vmatpush2.msra.mxu0 0.0
        %897 = vmatprep.subr.mxu0 0.0
        %898 = vmatpush2.msra.mxu0 0.0
        %899 = vmatprep.mubr.f32.mxu0 0.0
        %900 = vmatmul.mubr.f32.gmra.mxu0 %v263
        %v901 = vpop.f32.mrf.mxu0
        %v902 = vadd.f32 0.0, %v901
        %v903 = vpop.f32.mrf.mxu0
        %v904 = vadd.f32 0.0, %v903
        %905 = vmatprep.mubr.f32.mxu0 0.0
        %906 = vmatmul.mubr.f32.gmra.mxu0 %v266
        %v907 = vpop.f32.mrf.mxu0
        %v908 = vadd.f32 0.0, %v907
        %v909 = vpop.f32.mrf.mxu0
        %v910 = vadd.f32 0.0, %v909
        %911 = vmatprep.mubr.f32.mxu0 0.0
        %912 = vmatmul.mubr.f32.gmra.mxu0 %v269
        %v913 = vpop.f32.mrf.mxu0
        %v914 = vadd.f32 0.0, %v913
        %v915 = vpop.f32.mrf.mxu0
        %v916 = vadd.f32 0.0, %v915
        %917 = vmatprep.mubr.f32.mxu0 0.0
        %918 = vmatmul.mubr.f32.gmra.mxu0 %v272
        %v919 = vpop.f32.mrf.mxu0
        %v920 = vadd.f32 0.0, %v919
        %v921 = vpop.f32.mrf.mxu0
        %v922 = vadd.f32 0.0, %v921
        %923 = vdwg.mxu0
        %924 = vmatprep.subr.mxu0 0.0
        %925 = vmatpush1.msra.mxu0 0.0
        %926 = vmatprep.subr.mxu0 0.0
        %927 = vmatpush1.msra.mxu0 0.0
        %928 = vmatprep.subr.mxu0 0.0
        %929 = vmatpush1.msra.mxu0 0.0
        %930 = vmatprep.subr.mxu0 0.0
        %931 = vmatpush1.msra.mxu0 0.0
        %932 = vmatprep.subr.mxu0 0.0
        %933 = vmatpush1.msra.mxu0 0.0
        %934 = vmatprep.subr.mxu0 0.0
        %935 = vmatpush1.msra.mxu0 0.0
        %936 = vmatprep.subr.mxu0 0.0
        %937 = vmatpush1.msra.mxu0 0.0
        %938 = vmatprep.subr.mxu0 0.0
        %939 = vmatpush1.msra.mxu0 0.0
        %940 = vmatprep.subr.mxu0 0.0
        %941 = vmatpush1.msra.mxu0 0.0
        %942 = vmatprep.subr.mxu0 0.0
        %943 = vmatpush1.msra.mxu0 0.0
        %944 = vmatprep.subr.mxu0 0.0
        %945 = vmatpush1.msra.mxu0 0.0
        %946 = vmatprep.subr.mxu0 0.0
        %947 = vmatpush1.msra.mxu0 0.0
        %948 = vmatprep.subr.mxu0 0.0
        %949 = vmatpush1.msra.mxu0 0.0
        %950 = vmatprep.subr.mxu0 0.0
        %951 = vmatpush1.msra.mxu0 0.0
        %952 = vmatprep.subr.mxu0 %v834
        %953 = vmatpush1.msra.mxu0 %v833
        %954 = vmatprep.subr.mxu0 %v830
        %955 = vmatpush1.msra.mxu0 %v829
        %956 = vmatprep.subr.mxu0 0.0
        %957 = vmatpush2.msra.mxu0 0.0
        %958 = vmatprep.subr.mxu0 0.0
        %959 = vmatpush2.msra.mxu0 0.0
        %960 = vmatprep.subr.mxu0 0.0
        %961 = vmatpush2.msra.mxu0 0.0
        %962 = vmatprep.subr.mxu0 0.0
        %963 = vmatpush2.msra.mxu0 0.0
        %964 = vmatprep.subr.mxu0 0.0
        %965 = vmatpush2.msra.mxu0 0.0
        %966 = vmatprep.subr.mxu0 0.0
        %967 = vmatpush2.msra.mxu0 0.0
        %968 = vmatprep.subr.mxu0 0.0
        %969 = vmatpush2.msra.mxu0 0.0
        %970 = vmatprep.subr.mxu0 0.0
        %971 = vmatpush2.msra.mxu0 0.0
        %972 = vmatprep.subr.mxu0 0.0
        %973 = vmatpush2.msra.mxu0 0.0
        %974 = vmatprep.subr.mxu0 0.0
        %975 = vmatpush2.msra.mxu0 0.0
        %976 = vmatprep.subr.mxu0 0.0
        %977 = vmatpush2.msra.mxu0 0.0
        %978 = vmatprep.subr.mxu0 0.0
        %979 = vmatpush2.msra.mxu0 0.0
        %980 = vmatprep.subr.mxu0 0.0
        %981 = vmatpush2.msra.mxu0 0.0
        %982 = vmatprep.subr.mxu0 0.0
        %983 = vmatpush2.msra.mxu0 0.0
        %984 = vmatprep.subr.mxu0 0.0
        %985 = vmatpush2.msra.mxu0 0.0
        %986 = vmatprep.subr.mxu0 0.0
        %987 = vmatpush2.msra.mxu0 0.0
        %988 = vmatprep.mubr.f32.mxu0 0.0
        %989 = vmatmul.mubr.f32.gmra.mxu0 %v263
        %v990 = vpop.f32.mrf.mxu0
        %v991 = vadd.f32 0.0, %v990
        %v992 = vpop.f32.mrf.mxu0
        %v993 = vadd.f32 0.0, %v992
        %994 = vmatprep.mubr.f32.mxu0 0.0
        %995 = vmatmul.mubr.f32.gmra.mxu0 %v266
        %v996 = vpop.f32.mrf.mxu0
        %v997 = vadd.f32 0.0, %v996
        %v998 = vpop.f32.mrf.mxu0
        %v999 = vadd.f32 0.0, %v998
        %1000 = vmatprep.mubr.f32.mxu0 0.0
        %1001 = vmatmul.mubr.f32.gmra.mxu0 %v269
        %v1002 = vpop.f32.mrf.mxu0
        %v1003 = vadd.f32 0.0, %v1002
        %v1004 = vpop.f32.mrf.mxu0
        %v1005 = vadd.f32 0.0, %v1004
        %1006 = vmatprep.mubr.f32.mxu0 0.0
        %1007 = vmatmul.mubr.f32.gmra.mxu0 %v272
        %v1008 = vpop.f32.mrf.mxu0
        %v1009 = vadd.f32 0.0, %v1008
        %v1010 = vpop.f32.mrf.mxu0
        %v1011 = vadd.f32 0.0, %v1010
        %1012 = vdwg.mxu0
        %v1013 = vmax.f32 %v341, %v528
        %v1014 = vmax.f32 %v343, %v530
        %v1015 = vmax.f32 %v430, %v617
        %v1016 = vmax.f32 %v432, %v619
        %v1017 = vmax.f32 %v347, %v534
        %v1018 = vmax.f32 %v349, %v536
        %v1019 = vmax.f32 %v436, %v623
        %v1020 = vmax.f32 %v438, %v625
        %v1021 = vmax.f32 %v353, %v540
        %v1022 = vmax.f32 %v355, %v542
        %v1023 = vmax.f32 %v442, %v629
        %v1024 = vmax.f32 %v444, %v631
        %v1025 = vmax.f32 %v359, %v546
        %v1026 = vmax.f32 %v361, %v548
        %v1027 = vmax.f32 %v448, %v635
        %v1028 = vmax.f32 %v450, %v637
        %v1029 = vmax.f32 %v715, %v902
        %v1030 = vmax.f32 %v717, %v904
        %v1031 = vmax.f32 %v804, %v991
        %v1032 = vmax.f32 %v806, %v993
        %v1033 = vmax.f32 %v721, %v908
        %v1034 = vmax.f32 %v723, %v910
        %v1035 = vmax.f32 %v810, %v997
        %v1036 = vmax.f32 %v812, %v999
        %v1037 = vmax.f32 %v727, %v914
        %v1038 = vmax.f32 %v729, %v916
        %v1039 = vmax.f32 %v816, %v1003
        %v1040 = vmax.f32 %v818, %v1005
        %v1041 = vmax.f32 %v733, %v920
        %v1042 = vmax.f32 %v735, %v922
        %v1043 = vmax.f32 %v822, %v1009
        %v1044 = vmax.f32 %v824, %v1011
        %v1045 = vmax.f32 %v1013, %v1029
        %v1046 = vmax.f32 %v1014, %v1030
        %v1047 = vmax.f32 %v1015, %v1031
        %v1048 = vmax.f32 %v1016, %v1032
        %v1049 = vmax.f32 %v1017, %v1033
        %v1050 = vmax.f32 %v1018, %v1034
        %v1051 = vmax.f32 %v1019, %v1035
        %v1052 = vmax.f32 %v1020, %v1036
        %v1053 = vmax.f32 %v1021, %v1037
        %v1054 = vmax.f32 %v1022, %v1038
        %v1055 = vmax.f32 %v1023, %v1039
        %v1056 = vmax.f32 %v1024, %v1040
        %v1057 = vmax.f32 %v1025, %v1041
        %v1058 = vmax.f32 %v1026, %v1042
        %v1059 = vmax.f32 %v1027, %v1043
        %v1060 = vmax.f32 %v1028, %v1044
        %v1061 = vld [vmem:[%s2] sm:$0xff]
        %v1062 = vld [vmem:[%s2 + $0x8] sm:$0xff]
        %v1063 = vld [vmem:[%s2 + $0x10] sm:$0xff]
        %v1064 = vld [vmem:[%s2 + $0x18] sm:$0xff]
        %1066 = vset.pattern.permute.xlu0 0
        %1067 = vperm.xlu0 %1066, %v1061
        %v1068 = vpop.permute.xlu0 %1067
        %1071 = vset.pattern.permute.xlu0 0
        %1072 = vperm.xlu0 %1071, %v1062
        %v1073 = vpop.permute.xlu0 %1072
        %1076 = vset.pattern.permute.xlu0 0
        %1077 = vperm.xlu0 %1076, %v1063
        %v1078 = vpop.permute.xlu0 %1077
        %1081 = vset.pattern.permute.xlu0 0
        %1082 = vperm.xlu0 %1081, %v1064
        %v1083 = vpop.permute.xlu0 %1082
        %v1085 = vadd.f32 %v1045, %v1068
        %v1086 = vadd.f32 %v1046, %v1068
        %v1087 = vadd.f32 %v1047, %v1068
        %v1088 = vadd.f32 %v1048, %v1068
        %v1089 = vadd.f32 %v1049, %v1073
        %v1090 = vadd.f32 %v1050, %v1073
        %v1091 = vadd.f32 %v1051, %v1073
        %v1092 = vadd.f32 %v1052, %v1073
        %v1093 = vadd.f32 %v1053, %v1078
        %v1094 = vadd.f32 %v1054, %v1078
        %v1095 = vadd.f32 %v1055, %v1078
        %v1096 = vadd.f32 %v1056, %v1078
        %v1097 = vadd.f32 %v1057, %v1083
        %v1098 = vadd.f32 %v1058, %v1083
        %v1099 = vadd.f32 %v1059, %v1083
        %v1100 = vadd.f32 %v1060, %v1083
        %v1101 = vmax.f32 %v1085, 0.0
        %v1102 = vmax.f32 %v1086, 0.0
        %v1103 = vmax.f32 %v1087, 0.0
        %v1104 = vmax.f32 %v1088, 0.0
        %v1105 = vmax.f32 %v1089, 0.0
        %v1106 = vmax.f32 %v1090, 0.0
        %v1107 = vmax.f32 %v1091, 0.0
        %v1108 = vmax.f32 %v1092, 0.0
        %v1109 = vmax.f32 %v1093, 0.0
        %v1110 = vmax.f32 %v1094, 0.0
        %v1111 = vmax.f32 %v1095, 0.0
        %v1112 = vmax.f32 %v1096, 0.0
        %v1113 = vmax.f32 %v1097, 0.0
        %v1114 = vmax.f32 %v1098, 0.0
        %v1115 = vmax.f32 %v1099, 0.0
        %v1116 = vmax.f32 %v1100, 0.0
        %1117 = vst [vmem:[%s246] sm:$0xff] %v1101
        %1118 = vst [vmem:[%s246 + $0x8] sm:$0xff] %v1102
        %1119 = vst [vmem:[%s246 + $0x10] sm:$0xff] %v1103
        %1120 = vst [vmem:[%s246 + $0x18] sm:$0xff] %v1104
        %1121 = vst [vmem:[%s246 + $0x20] sm:$0xff] %v1105
        %1122 = vst [vmem:[%s246 + $0x28] sm:$0xff] %v1106
        %1123 = vst [vmem:[%s246 + $0x30] sm:$0xff] %v1107
        %1124 = vst [vmem:[%s246 + $0x38] sm:$0xff] %v1108
        %1125 = vst [vmem:[%s246 + $0x40] sm:$0xff] %v1109
        %1126 = vst [vmem:[%s246 + $0x48] sm:$0xff] %v1110
        %1127 = vst [vmem:[%s246 + $0x50] sm:$0xff] %v1111
        %1128 = vst [vmem:[%s246 + $0x58] sm:$0xff] %v1112
        %1129 = vst [vmem:[%s246 + $0x60] sm:$0xff] %v1113
        %1130 = vst [vmem:[%s246 + $0x68] sm:$0xff] %v1114
        %1131 = vst [vmem:[%s246 + $0x70] sm:$0xff] %v1115
        %1132 = vst [vmem:[%s246 + $0x78] sm:$0xff] %v1116
        %s1133 = sand.u32 %s90, 1
        %s1134 = sand.u32 %s90, 1
        %s1135 = smul.addr %s1134, 128
        %s1136 = scalar_lea.vmem [#allocation3], %s1135
        // Predicated region
        $region56: #{regional_cnn_forward.3} parent=50 // pred_check
          %p1137 = pneg %p100
        $region57: #{regional_cnn_forward.3} parent=50 // pred_check_branch
          %1139 = sbr.rel (%p1137) target = $region59
        $region58: #{regional_cnn_forward.3} parent=50 // pred_region
          %s1140 = smul.u32 4, %s14
          %s1141 = smul.addr %s1140, 8
          %s1142 = scalar_lea.vmem %s3, %s1141
          // Predicated region
          $region60: #{regional_cnn_forward.3} parent=58 // pred_check
            _
          $region61: #{regional_cnn_forward.3} parent=58 // pred_check_branch
            %1144 = sbr.rel (0) target = $region63
          $region62: #{regional_cnn_forward.3} parent=58 // pred_region
            // Predicated region
            $region64: #{regional_cnn_forward.3} parent=62 // pred_check
              _
            $region65: #{regional_cnn_forward.3} parent=62 // pred_check_branch
              %1146 = sbr.rel (0) target = $region67
            $region66: #{regional_cnn_forward.3} parent=62 // pred_region
              loop: start=0, step=1, limit=1
              $region68: #{regional_cnn_forward.3} parent=66 // loop_pre_header
                _
              $region69: #{regional_cnn_forward.3} parent=66 // loop_header
                %s1148 = sphi 0, %s1152
                %p1149 = scmp.ge.s32.totalorder %s1148, 1
                %s1153 = sphi %s1136, %s1136
                %s1154 = sphi %s1142, %s1142
              $region70: #{regional_cnn_forward.3} parent=66 // loop_header_branch
                %1151 = sbr.rel (%p1149) target = $region74
              $region71: #{regional_cnn_forward.3} parent=66 // loop_body
                %v1155 = vld [vmem:[%s1153] sm:$0xff]
                %1156 = vst [vmem:[%s1154] sm:$0xff] %v1155
                %v1157 = vld [vmem:[%s1153 + $0x8] sm:$0xff]
                %1158 = vst [vmem:[%s1154 + $0x8] sm:$0xff] %v1157
                %v1159 = vld [vmem:[%s1153 + $0x10] sm:$0xff]
                %1160 = vst [vmem:[%s1154 + $0x10] sm:$0xff] %v1159
                %v1161 = vld [vmem:[%s1153 + $0x18] sm:$0xff]
                %1162 = vst [vmem:[%s1154 + $0x18] sm:$0xff] %v1161
                %v1163 = vld [vmem:[%s1153 + $0x20] sm:$0xff]
                %1164 = vst [vmem:[%s1154 + $0x60] sm:$0xff] %v1163
                %v1165 = vld [vmem:[%s1153 + $0x28] sm:$0xff]
                %1166 = vst [vmem:[%s1154 + $0x68] sm:$0xff] %v1165
                %v1167 = vld [vmem:[%s1153 + $0x30] sm:$0xff]
                %1168 = vst [vmem:[%s1154 + $0x70] sm:$0xff] %v1167
                %v1169 = vld [vmem:[%s1153 + $0x38] sm:$0xff]
                %1170 = vst [vmem:[%s1154 + $0x78] sm:$0xff] %v1169
                %v1171 = vld [vmem:[%s1153 + $0x40] sm:$0xff]
                %1172 = vst [vmem:[%s1154 + $0xc0] sm:$0xff] %v1171
                %v1173 = vld [vmem:[%s1153 + $0x48] sm:$0xff]
                %1174 = vst [vmem:[%s1154 + $0xc8] sm:$0xff] %v1173
                %v1175 = vld [vmem:[%s1153 + $0x50] sm:$0xff]
                %1176 = vst [vmem:[%s1154 + $0xd0] sm:$0xff] %v1175
                %v1177 = vld [vmem:[%s1153 + $0x58] sm:$0xff]
                %1178 = vst [vmem:[%s1154 + $0xd8] sm:$0xff] %v1177
                %v1179 = vld [vmem:[%s1153 + $0x60] sm:$0xff]
                %1180 = vst [vmem:[%s1154 + $0x120] sm:$0xff] %v1179
                %v1181 = vld [vmem:[%s1153 + $0x68] sm:$0xff]
                %1182 = vst [vmem:[%s1154 + $0x128] sm:$0xff] %v1181
                %v1183 = vld [vmem:[%s1153 + $0x70] sm:$0xff]
                %1184 = vst [vmem:[%s1154 + $0x130] sm:$0xff] %v1183
                %v1185 = vld [vmem:[%s1153 + $0x78] sm:$0xff]
                %1186 = vst [vmem:[%s1154 + $0x138] sm:$0xff] %v1185
              $region72: #{regional_cnn_forward.3} parent=66 // loop_footer
                %s1152 = sadd.s32 1, %s1148
              $region73: #{regional_cnn_forward.3} parent=66 // loop_footer_branch
                %1147 = sbr.rel target = $region69
              $region74: #{regional_cnn_forward.3} parent=66 // loop_exit
                _
            $region67: #{regional_cnn_forward.3} parent=62 // pred_fallthru
              _
            // Predicated region
            $region75: #{regional_cnn_forward.3} parent=62 // pred_check
              _
            $region76: #{regional_cnn_forward.3} parent=62 // pred_check_branch
              %1188 = sbr.rel target = $region78
            $region77: #{regional_cnn_forward.3} parent=62 // pred_region
              _
            $region78: #{regional_cnn_forward.3} parent=62 // pred_fallthru
              _
          $region63: #{regional_cnn_forward.3} parent=58 // pred_fallthru
            _
          %1189 = vnop
        $region59: #{regional_cnn_forward.3} parent=50 // pred_fallthru
          _
      $region51: #{regional_cnn_forward.3} parent=5 // pred_fallthru
        _
      %p1190 = scmp.le.s32.totalorder 2, %s9
      // Predicated region
      $region79: #{regional_cnn_forward.3} parent=5 // pred_check
        %p1191 = pneg %p1190
      $region80: #{regional_cnn_forward.3} parent=5 // pred_check_branch
        %1193 = sbr.rel (%p1191) target = $region82
      $region81: #{regional_cnn_forward.3} parent=5 // pred_region
        %s1194 = ssub.s32 %s9, 2
        // Predicated region
        $region83: #{regional_cnn_forward.3} parent=81 // pred_check
          %p1195 = pneg %p106
        $region84: #{regional_cnn_forward.3} parent=81 // pred_check_branch
          %1197 = sbr.rel (%p1195) target = $region86
        $region85: #{regional_cnn_forward.3} parent=81 // pred_region
          %s1198 = sand.u32 %s91, 1
          %s1199 = sand.u32 %s91, 1
          %s1200 = smul.addr %s1199, 128
          %s1201 = scalar_lea.vmem [#allocation3], %s1200
        $region86: #{regional_cnn_forward.3} parent=81 // pred_fallthru
          _
      $region82: #{regional_cnn_forward.3} parent=5 // pred_fallthru
        _
    $region6: #{regional_cnn_forward.3} parent=1 // loop_footer
      %s13 = sadd.s32 1, %s9
    $region7: #{regional_cnn_forward.3} parent=1 // loop_footer_branch
      %8 = sbr.rel target = $region3
    $region8: #{regional_cnn_forward.3} parent=1 // loop_exit
      _

// kernel: regional_cnn_forward.4
$region0: #{regional_cnn_forward.4}
  #allocation0 [shape = 'u32[]', space=smem, size = 0x4, offset = 0x4, fixed_abs, tag = 'smem constant byte address 0x4 - core index']
  #allocation1 [shape = 'u32[144,128]{1,0:T(1,128)}', space=vmem, size = 0x12000, scoped, tag = 'internal scratch']
  %s0 = inlined_call_operand.vmem [shape: f32[4,192,128], index: 0, kind: input, shape index: {}]
  %s1 = inlined_call_operand.vmem [shape: f32[32,192], index: 1, kind: input, shape index: {}]
  %s2 = inlined_call_operand.vmem [shape: f32[32,1], index: 2, kind: input, shape index: {}]
  %s3 = inlined_call_operand.vmem [shape: f32[32,128], index: 3, kind: output, shape index: {}]
  %s4 = sld [smem:[#allocation0]]
  $region22: #{regional_cnn_forward.4} parent=0
    _
  %s6 = ssub.s32 1, %s4
  %s7 = scalar_select 0, %s6, %s4
  // Predicated region
  $region2: #{regional_cnn_forward.4} parent=0 // pred_check
    _
  $region3: #{regional_cnn_forward.4} parent=0 // pred_check_branch
    %9 = sbr.rel (0) target = $region5
  $region4: #{regional_cnn_forward.4} parent=0 // pred_region
    _
  $region5: #{regional_cnn_forward.4} parent=0 // pred_fallthru
    _
  // Predicated region
  $region6: #{regional_cnn_forward.4} parent=0 // pred_check
    _
  $region7: #{regional_cnn_forward.4} parent=0 // pred_check_branch
    %11 = sbr.rel (0) target = $region9
  $region8: #{regional_cnn_forward.4} parent=0 // pred_region
    _
  $region9: #{regional_cnn_forward.4} parent=0 // pred_fallthru
    _
  // Predicated region
  $region10: #{regional_cnn_forward.4} parent=0 // pred_check
    _
  $region11: #{regional_cnn_forward.4} parent=0 // pred_check_branch
    %13 = sbr.rel (0) target = $region13
  $region12: #{regional_cnn_forward.4} parent=0 // pred_region
    _
  $region13: #{regional_cnn_forward.4} parent=0 // pred_fallthru
    _
  %v14 = vld [vmem:[%s1] sm:$0xff]
  %v15 = vld [vmem:[%s1 + $0x8] sm:$0xff]
  %v16 = vld [vmem:[%s1 + $0x10] sm:$0xff]
  %v17 = vld [vmem:[%s1 + $0x18] sm:$0xff]
  %v18 = vld [vmem:[%s1 + $0x20] sm:$0xff]
  %v19 = vld [vmem:[%s1 + $0x28] sm:$0xff]
  %v20 = vld [vmem:[%s1 + $0x30] sm:$0xff]
  %v21 = vld [vmem:[%s1 + $0x38] sm:$0xff]
  %v22 = vld [vmem:[%s0] sm:$0xff]
  %v23 = vld [vmem:[%s0 + $0x8] sm:$0xff]
  %v24 = vld [vmem:[%s0 + $0x10] sm:$0xff]
  %v25 = vld [vmem:[%s0 + $0x18] sm:$0xff]
  %v26 = vld [vmem:[%s0 + $0x20] sm:$0xff]
  %v27 = vld [vmem:[%s0 + $0x28] sm:$0xff]
  %v28 = vld [vmem:[%s0 + $0x30] sm:$0xff]
  %v29 = vld [vmem:[%s0 + $0x38] sm:$0xff]
  %v30 = vld [vmem:[%s0 + $0x40] sm:$0xff]
  %v31 = vld [vmem:[%s0 + $0x48] sm:$0xff]
  %v32 = vld [vmem:[%s0 + $0x50] sm:$0xff]
  %v33 = vld [vmem:[%s0 + $0x58] sm:$0xff]
  %v34 = vld [vmem:[%s0 + $0x60] sm:$0xff]
  %v35 = vld [vmem:[%s0 + $0x68] sm:$0xff]
  %v36 = vld [vmem:[%s0 + $0x70] sm:$0xff]
  %v37 = vld [vmem:[%s0 + $0x78] sm:$0xff]
  %v38 = vld [vmem:[%s0 + $0x80] sm:$0xff]
  %v39 = vld [vmem:[%s0 + $0x88] sm:$0xff]
  %v40 = vld [vmem:[%s0 + $0x90] sm:$0xff]
  %v41 = vld [vmem:[%s0 + $0x98] sm:$0xff]
  %v42 = vld [vmem:[%s0 + $0xa0] sm:$0xff]
  %v43 = vld [vmem:[%s0 + $0xa8] sm:$0xff]
  %v44 = vld [vmem:[%s0 + $0xb0] sm:$0xff]
  %v45 = vld [vmem:[%s0 + $0xb8] sm:$0xff]
  %vm46 = vcmask 523264
  %v48 = vsel %vm46, %v15, 0
  %v51 = vsel %vm46, %v17, 0
  %v54 = vsel %vm46, %v19, 0
  %v57 = vsel %vm46, %v21, 0
  %59 = vmatprep.subr.mxu0 0.0
  %60 = vmatpush1.msra.mxu0 %v37
  %61 = vmatprep.subr.mxu0 0.0
  %62 = vmatpush1.msra.mxu0 %v36
  %63 = vmatprep.subr.mxu0 0.0
  %64 = vmatpush1.msra.mxu0 %v35
  %65 = vmatprep.subr.mxu0 0.0
  %66 = vmatpush1.msra.mxu0 %v34
  %67 = vmatprep.subr.mxu0 0.0
  %68 = vmatpush1.msra.mxu0 %v33
  %69 = vmatprep.subr.mxu0 0.0
  %70 = vmatpush1.msra.mxu0 %v32
  %71 = vmatprep.subr.mxu0 0.0
  %72 = vmatpush1.msra.mxu0 %v31
  %73 = vmatprep.subr.mxu0 0.0
  %74 = vmatpush1.msra.mxu0 %v30
  %75 = vmatprep.subr.mxu0 0.0
  %76 = vmatpush1.msra.mxu0 %v29
  %77 = vmatprep.subr.mxu0 0.0
  %78 = vmatpush1.msra.mxu0 %v28
  %79 = vmatprep.subr.mxu0 0.0
  %80 = vmatpush1.msra.mxu0 %v27
  %81 = vmatprep.subr.mxu0 0.0
  %82 = vmatpush1.msra.mxu0 %v26
  %83 = vmatprep.subr.mxu0 0.0
  %84 = vmatpush1.msra.mxu0 %v25
  %85 = vmatprep.subr.mxu0 0.0
  %86 = vmatpush1.msra.mxu0 %v24
  %87 = vmatprep.subr.mxu0 0.0
  %88 = vmatpush1.msra.mxu0 %v23
  %89 = vmatprep.subr.mxu0 0.0
  %90 = vmatpush1.msra.mxu0 %v22
  %91 = vmatprep.subr.mxu0 0.0
  %92 = vmatpush2.msra.mxu0 0.0
  %93 = vmatprep.subr.mxu0 0.0
  %94 = vmatpush2.msra.mxu0 0.0
  %95 = vmatprep.subr.mxu0 0.0
  %96 = vmatpush2.msra.mxu0 0.0
  %97 = vmatprep.subr.mxu0 0.0
  %98 = vmatpush2.msra.mxu0 0.0
  %99 = vmatprep.subr.mxu0 0.0
  %100 = vmatpush2.msra.mxu0 0.0
  %101 = vmatprep.subr.mxu0 0.0
  %102 = vmatpush2.msra.mxu0 0.0
  %103 = vmatprep.subr.mxu0 0.0
  %104 = vmatpush2.msra.mxu0 0.0
  %105 = vmatprep.subr.mxu0 0.0
  %106 = vmatpush2.msra.mxu0 0.0
  %107 = vmatprep.subr.mxu0 0.0
  %108 = vmatpush2.msra.mxu0 %v45
  %109 = vmatprep.subr.mxu0 0.0
  %110 = vmatpush2.msra.mxu0 %v44
  %111 = vmatprep.subr.mxu0 0.0
  %112 = vmatpush2.msra.mxu0 %v43
  %113 = vmatprep.subr.mxu0 0.0
  %114 = vmatpush2.msra.mxu0 %v42
  %115 = vmatprep.subr.mxu0 0.0
  %116 = vmatpush2.msra.mxu0 %v41
  %117 = vmatprep.subr.mxu0 0.0
  %118 = vmatpush2.msra.mxu0 %v40
  %119 = vmatprep.subr.mxu0 0.0
  %120 = vmatpush2.msra.mxu0 %v39
  %121 = vmatprep.subr.mxu0 0.0
  %122 = vmatpush2.msra.mxu0 %v38
  %123 = vmatprep.mubr.f32.mxu0 %v48
  %124 = vmatmul.mubr.f32.gmra.mxu0 %v14
  %v125 = vpop.f32.mrf.mxu0
  %v126 = vadd.f32 0.0, %v125
  %v127 = vpop.f32.mrf.mxu0
  %128 = vmatprep.mubr.f32.mxu0 %v51
  %129 = vmatmul.mubr.f32.gmra.mxu0 %v16
  %v130 = vpop.f32.mrf.mxu0
  %v131 = vadd.f32 0.0, %v130
  %v132 = vpop.f32.mrf.mxu0
  %133 = vmatprep.mubr.f32.mxu0 %v54
  %134 = vmatmul.mubr.f32.gmra.mxu0 %v18
  %v135 = vpop.f32.mrf.mxu0
  %v136 = vadd.f32 0.0, %v135
  %v137 = vpop.f32.mrf.mxu0
  %138 = vmatprep.mubr.f32.mxu0 %v57
  %139 = vmatmul.mubr.f32.gmra.mxu0 %v20
  %v140 = vpop.f32.mrf.mxu0
  %v141 = vadd.f32 0.0, %v140
  %v142 = vpop.f32.mrf.mxu0
  %143 = vdwg.mxu0
  %s144 = scalar_lea.vmem %s0, 192
  %v145 = vld [vmem:[%s144] sm:$0xff]
  %v146 = vld [vmem:[%s144 + $0x8] sm:$0xff]
  %v147 = vld [vmem:[%s144 + $0x10] sm:$0xff]
  %v148 = vld [vmem:[%s144 + $0x18] sm:$0xff]
  %v149 = vld [vmem:[%s144 + $0x20] sm:$0xff]
  %v150 = vld [vmem:[%s144 + $0x28] sm:$0xff]
  %v151 = vld [vmem:[%s144 + $0x30] sm:$0xff]
  %v152 = vld [vmem:[%s144 + $0x38] sm:$0xff]
  %v153 = vld [vmem:[%s144 + $0x40] sm:$0xff]
  %v154 = vld [vmem:[%s144 + $0x48] sm:$0xff]
  %v155 = vld [vmem:[%s144 + $0x50] sm:$0xff]
  %v156 = vld [vmem:[%s144 + $0x58] sm:$0xff]
  %v157 = vld [vmem:[%s144 + $0x60] sm:$0xff]
  %v158 = vld [vmem:[%s144 + $0x68] sm:$0xff]
  %v159 = vld [vmem:[%s144 + $0x70] sm:$0xff]
  %v160 = vld [vmem:[%s144 + $0x78] sm:$0xff]
  %v161 = vld [vmem:[%s144 + $0x80] sm:$0xff]
  %v162 = vld [vmem:[%s144 + $0x88] sm:$0xff]
  %v163 = vld [vmem:[%s144 + $0x90] sm:$0xff]
  %v164 = vld [vmem:[%s144 + $0x98] sm:$0xff]
  %v165 = vld [vmem:[%s144 + $0xa0] sm:$0xff]
  %v166 = vld [vmem:[%s144 + $0xa8] sm:$0xff]
  %v167 = vld [vmem:[%s144 + $0xb0] sm:$0xff]
  %v168 = vld [vmem:[%s144 + $0xb8] sm:$0xff]
  %169 = vmatprep.subr.mxu0 0.0
  %170 = vmatpush1.msra.mxu0 %v160
  %171 = vmatprep.subr.mxu0 0.0
  %172 = vmatpush1.msra.mxu0 %v159
  %173 = vmatprep.subr.mxu0 0.0
  %174 = vmatpush1.msra.mxu0 %v158
  %175 = vmatprep.subr.mxu0 0.0
  %176 = vmatpush1.msra.mxu0 %v157
  %177 = vmatprep.subr.mxu0 0.0
  %178 = vmatpush1.msra.mxu0 %v156
  %179 = vmatprep.subr.mxu0 0.0
  %180 = vmatpush1.msra.mxu0 %v155
  %181 = vmatprep.subr.mxu0 0.0
  %182 = vmatpush1.msra.mxu0 %v154
  %183 = vmatprep.subr.mxu0 0.0
  %184 = vmatpush1.msra.mxu0 %v153
  %185 = vmatprep.subr.mxu0 0.0
  %186 = vmatpush1.msra.mxu0 %v152
  %187 = vmatprep.subr.mxu0 0.0
  %188 = vmatpush1.msra.mxu0 %v151
  %189 = vmatprep.subr.mxu0 0.0
  %190 = vmatpush1.msra.mxu0 %v150
  %191 = vmatprep.subr.mxu0 0.0
  %192 = vmatpush1.msra.mxu0 %v149
  %193 = vmatprep.subr.mxu0 0.0
  %194 = vmatpush1.msra.mxu0 %v148
  %195 = vmatprep.subr.mxu0 0.0
  %196 = vmatpush1.msra.mxu0 %v147
  %197 = vmatprep.subr.mxu0 0.0
  %198 = vmatpush1.msra.mxu0 %v146
  %199 = vmatprep.subr.mxu0 0.0
  %200 = vmatpush1.msra.mxu0 %v145
  %201 = vmatprep.subr.mxu0 0.0
  %202 = vmatpush2.msra.mxu0 0.0
  %203 = vmatprep.subr.mxu0 0.0
  %204 = vmatpush2.msra.mxu0 0.0
  %205 = vmatprep.subr.mxu0 0.0
  %206 = vmatpush2.msra.mxu0 0.0
  %207 = vmatprep.subr.mxu0 0.0
  %208 = vmatpush2.msra.mxu0 0.0
  %209 = vmatprep.subr.mxu0 0.0
  %210 = vmatpush2.msra.mxu0 0.0
  %211 = vmatprep.subr.mxu0 0.0
  %212 = vmatpush2.msra.mxu0 0.0
  %213 = vmatprep.subr.mxu0 0.0
  %214 = vmatpush2.msra.mxu0 0.0
  %215 = vmatprep.subr.mxu0 0.0
  %216 = vmatpush2.msra.mxu0 0.0
  %217 = vmatprep.subr.mxu0 0.0
  %218 = vmatpush2.msra.mxu0 %v168
  %219 = vmatprep.subr.mxu0 0.0
  %220 = vmatpush2.msra.mxu0 %v167
  %221 = vmatprep.subr.mxu0 0.0
  %222 = vmatpush2.msra.mxu0 %v166
  %223 = vmatprep.subr.mxu0 0.0
  %224 = vmatpush2.msra.mxu0 %v165
  %225 = vmatprep.subr.mxu0 0.0
  %226 = vmatpush2.msra.mxu0 %v164
  %227 = vmatprep.subr.mxu0 0.0
  %228 = vmatpush2.msra.mxu0 %v163
  %229 = vmatprep.subr.mxu0 0.0
  %230 = vmatpush2.msra.mxu0 %v162
  %231 = vmatprep.subr.mxu0 0.0
  %232 = vmatpush2.msra.mxu0 %v161
  %233 = vmatprep.mubr.f32.mxu0 %v48
  %234 = vmatmul.mubr.f32.gmra.mxu0 %v14
  %v235 = vpop.f32.mrf.mxu0
  %v236 = vadd.f32 0.0, %v235
  %v237 = vpop.f32.mrf.mxu0
  %238 = vmatprep.mubr.f32.mxu0 %v51
  %239 = vmatmul.mubr.f32.gmra.mxu0 %v16
  %v240 = vpop.f32.mrf.mxu0
  %v241 = vadd.f32 0.0, %v240
  %v242 = vpop.f32.mrf.mxu0
  %243 = vmatprep.mubr.f32.mxu0 %v54
  %244 = vmatmul.mubr.f32.gmra.mxu0 %v18
  %v245 = vpop.f32.mrf.mxu0
  %v246 = vadd.f32 0.0, %v245
  %v247 = vpop.f32.mrf.mxu0
  %248 = vmatprep.mubr.f32.mxu0 %v57
  %249 = vmatmul.mubr.f32.gmra.mxu0 %v20
  %v250 = vpop.f32.mrf.mxu0
  %v251 = vadd.f32 0.0, %v250
  %v252 = vpop.f32.mrf.mxu0
  %253 = vdwg.mxu0
  %s254 = scalar_lea.vmem %s0, 384
  %v255 = vld [vmem:[%s254] sm:$0xff]
  %v256 = vld [vmem:[%s254 + $0x8] sm:$0xff]
  %v257 = vld [vmem:[%s254 + $0x10] sm:$0xff]
  %v258 = vld [vmem:[%s254 + $0x18] sm:$0xff]
  %v259 = vld [vmem:[%s254 + $0x20] sm:$0xff]
  %v260 = vld [vmem:[%s254 + $0x28] sm:$0xff]
  %v261 = vld [vmem:[%s254 + $0x30] sm:$0xff]
  %v262 = vld [vmem:[%s254 + $0x38] sm:$0xff]
  %v263 = vld [vmem:[%s254 + $0x40] sm:$0xff]
  %v264 = vld [vmem:[%s254 + $0x48] sm:$0xff]
  %v265 = vld [vmem:[%s254 + $0x50] sm:$0xff]
  %v266 = vld [vmem:[%s254 + $0x58] sm:$0xff]
  %v267 = vld [vmem:[%s254 + $0x60] sm:$0xff]
  %v268 = vld [vmem:[%s254 + $0x68] sm:$0xff]
  %v269 = vld [vmem:[%s254 + $0x70] sm:$0xff]
  %v270 = vld [vmem:[%s254 + $0x78] sm:$0xff]
  %v271 = vld [vmem:[%s254 + $0x80] sm:$0xff]
  %v272 = vld [vmem:[%s254 + $0x88] sm:$0xff]
  %v273 = vld [vmem:[%s254 + $0x90] sm:$0xff]
  %v274 = vld [vmem:[%s254 + $0x98] sm:$0xff]
  %v275 = vld [vmem:[%s254 + $0xa0] sm:$0xff]
  %v276 = vld [vmem:[%s254 + $0xa8] sm:$0xff]
  %v277 = vld [vmem:[%s254 + $0xb0] sm:$0xff]
  %v278 = vld [vmem:[%s254 + $0xb8] sm:$0xff]
  %279 = vmatprep.subr.mxu0 0.0
  %280 = vmatpush1.msra.mxu0 %v270
  %281 = vmatprep.subr.mxu0 0.0
  %282 = vmatpush1.msra.mxu0 %v269
  %283 = vmatprep.subr.mxu0 0.0
  %284 = vmatpush1.msra.mxu0 %v268
  %285 = vmatprep.subr.mxu0 0.0
  %286 = vmatpush1.msra.mxu0 %v267
  %287 = vmatprep.subr.mxu0 0.0
  %288 = vmatpush1.msra.mxu0 %v266
  %289 = vmatprep.subr.mxu0 0.0
  %290 = vmatpush1.msra.mxu0 %v265
  %291 = vmatprep.subr.mxu0 0.0
  %292 = vmatpush1.msra.mxu0 %v264
  %293 = vmatprep.subr.mxu0 0.0
  %294 = vmatpush1.msra.mxu0 %v263
  %295 = vmatprep.subr.mxu0 0.0
  %296 = vmatpush1.msra.mxu0 %v262
  %297 = vmatprep.subr.mxu0 0.0
  %298 = vmatpush1.msra.mxu0 %v261
  %299 = vmatprep.subr.mxu0 0.0
  %300 = vmatpush1.msra.mxu0 %v260
  %301 = vmatprep.subr.mxu0 0.0
  %302 = vmatpush1.msra.mxu0 %v259
  %303 = vmatprep.subr.mxu0 0.0
  %304 = vmatpush1.msra.mxu0 %v258
  %305 = vmatprep.subr.mxu0 0.0
  %306 = vmatpush1.msra.mxu0 %v257
  %307 = vmatprep.subr.mxu0 0.0
  %308 = vmatpush1.msra.mxu0 %v256
  %309 = vmatprep.subr.mxu0 0.0
  %310 = vmatpush1.msra.mxu0 %v255
  %311 = vmatprep.subr.mxu0 0.0
  %312 = vmatpush2.msra.mxu0 0.0
  %313 = vmatprep.subr.mxu0 0.0
  %314 = vmatpush2.msra.mxu0 0.0
  %315 = vmatprep.subr.mxu0 0.0
  %316 = vmatpush2.msra.mxu0 0.0
  %317 = vmatprep.subr.mxu0 0.0
  %318 = vmatpush2.msra.mxu0 0.0
  %319 = vmatprep.subr.mxu0 0.0
  %320 = vmatpush2.msra.mxu0 0.0
  %321 = vmatprep.subr.mxu0 0.0
  %322 = vmatpush2.msra.mxu0 0.0
  %323 = vmatprep.subr.mxu0 0.0
  %324 = vmatpush2.msra.mxu0 0.0
  %325 = vmatprep.subr.mxu0 0.0
  %326 = vmatpush2.msra.mxu0 0.0
  %327 = vmatprep.subr.mxu0 0.0
  %328 = vmatpush2.msra.mxu0 %v278
  %329 = vmatprep.subr.mxu0 0.0
  %330 = vmatpush2.msra.mxu0 %v277
  %331 = vmatprep.subr.mxu0 0.0
  %332 = vmatpush2.msra.mxu0 %v276
  %333 = vmatprep.subr.mxu0 0.0
  %334 = vmatpush2.msra.mxu0 %v275
  %335 = vmatprep.subr.mxu0 0.0
  %336 = vmatpush2.msra.mxu0 %v274
  %337 = vmatprep.subr.mxu0 0.0
  %338 = vmatpush2.msra.mxu0 %v273
  %339 = vmatprep.subr.mxu0 0.0
  %340 = vmatpush2.msra.mxu0 %v272
  %341 = vmatprep.subr.mxu0 0.0
  %342 = vmatpush2.msra.mxu0 %v271
  %343 = vmatprep.mubr.f32.mxu0 %v48
  %344 = vmatmul.mubr.f32.gmra.mxu0 %v14
  %v345 = vpop.f32.mrf.mxu0
  %v346 = vadd.f32 0.0, %v345
  %v347 = vpop.f32.mrf.mxu0
  %348 = vmatprep.mubr.f32.mxu0 %v51
  %349 = vmatmul.mubr.f32.gmra.mxu0 %v16
  %v350 = vpop.f32.mrf.mxu0
  %v351 = vadd.f32 0.0, %v350
  %v352 = vpop.f32.mrf.mxu0
  %353 = vmatprep.mubr.f32.mxu0 %v54
  %354 = vmatmul.mubr.f32.gmra.mxu0 %v18
  %v355 = vpop.f32.mrf.mxu0
  %v356 = vadd.f32 0.0, %v355
  %v357 = vpop.f32.mrf.mxu0
  %358 = vmatprep.mubr.f32.mxu0 %v57
  %359 = vmatmul.mubr.f32.gmra.mxu0 %v20
  %v360 = vpop.f32.mrf.mxu0
  %v361 = vadd.f32 0.0, %v360
  %v362 = vpop.f32.mrf.mxu0
  %363 = vdwg.mxu0
  %s364 = scalar_lea.vmem %s0, 576
  %v365 = vld [vmem:[%s364] sm:$0xff]
  %v366 = vld [vmem:[%s364 + $0x8] sm:$0xff]
  %v367 = vld [vmem:[%s364 + $0x10] sm:$0xff]
  %v368 = vld [vmem:[%s364 + $0x18] sm:$0xff]
  %v369 = vld [vmem:[%s364 + $0x20] sm:$0xff]
  %v370 = vld [vmem:[%s364 + $0x28] sm:$0xff]
  %v371 = vld [vmem:[%s364 + $0x30] sm:$0xff]
  %v372 = vld [vmem:[%s364 + $0x38] sm:$0xff]
  %v373 = vld [vmem:[%s364 + $0x40] sm:$0xff]
  %v374 = vld [vmem:[%s364 + $0x48] sm:$0xff]
  %v375 = vld [vmem:[%s364 + $0x50] sm:$0xff]
  %v376 = vld [vmem:[%s364 + $0x58] sm:$0xff]
  %v377 = vld [vmem:[%s364 + $0x60] sm:$0xff]
  %v378 = vld [vmem:[%s364 + $0x68] sm:$0xff]
  %v379 = vld [vmem:[%s364 + $0x70] sm:$0xff]
  %v380 = vld [vmem:[%s364 + $0x78] sm:$0xff]
  %v381 = vld [vmem:[%s364 + $0x80] sm:$0xff]
  %v382 = vld [vmem:[%s364 + $0x88] sm:$0xff]
  %v383 = vld [vmem:[%s364 + $0x90] sm:$0xff]
  %v384 = vld [vmem:[%s364 + $0x98] sm:$0xff]
  %v385 = vld [vmem:[%s364 + $0xa0] sm:$0xff]
  %v386 = vld [vmem:[%s364 + $0xa8] sm:$0xff]
  %v387 = vld [vmem:[%s364 + $0xb0] sm:$0xff]
  %v388 = vld [vmem:[%s364 + $0xb8] sm:$0xff]
  %389 = vmatprep.subr.mxu0 0.0
  %390 = vmatpush1.msra.mxu0 %v380
  %391 = vmatprep.subr.mxu0 0.0
  %392 = vmatpush1.msra.mxu0 %v379
  %393 = vmatprep.subr.mxu0 0.0
  %394 = vmatpush1.msra.mxu0 %v378
  %395 = vmatprep.subr.mxu0 0.0
  %396 = vmatpush1.msra.mxu0 %v377
  %397 = vmatprep.subr.mxu0 0.0
  %398 = vmatpush1.msra.mxu0 %v376
  %399 = vmatprep.subr.mxu0 0.0
  %400 = vmatpush1.msra.mxu0 %v375
  %401 = vmatprep.subr.mxu0 0.0
  %402 = vmatpush1.msra.mxu0 %v374
  %403 = vmatprep.subr.mxu0 0.0
  %404 = vmatpush1.msra.mxu0 %v373
  %405 = vmatprep.subr.mxu0 0.0
  %406 = vmatpush1.msra.mxu0 %v372
  %407 = vmatprep.subr.mxu0 0.0
  %408 = vmatpush1.msra.mxu0 %v371
  %409 = vmatprep.subr.mxu0 0.0
  %410 = vmatpush1.msra.mxu0 %v370
  %411 = vmatprep.subr.mxu0 0.0
  %412 = vmatpush1.msra.mxu0 %v369
  %413 = vmatprep.subr.mxu0 0.0
  %414 = vmatpush1.msra.mxu0 %v368
  %415 = vmatprep.subr.mxu0 0.0
  %416 = vmatpush1.msra.mxu0 %v367
  %417 = vmatprep.subr.mxu0 0.0
  %418 = vmatpush1.msra.mxu0 %v366
  %419 = vmatprep.subr.mxu0 0.0
  %420 = vmatpush1.msra.mxu0 %v365
  %421 = vmatprep.subr.mxu0 0.0
  %422 = vmatpush2.msra.mxu0 0.0
  %423 = vmatprep.subr.mxu0 0.0
  %424 = vmatpush2.msra.mxu0 0.0
  %425 = vmatprep.subr.mxu0 0.0
  %426 = vmatpush2.msra.mxu0 0.0
  %427 = vmatprep.subr.mxu0 0.0
  %428 = vmatpush2.msra.mxu0 0.0
  %429 = vmatprep.subr.mxu0 0.0
  %430 = vmatpush2.msra.mxu0 0.0
  %431 = vmatprep.subr.mxu0 0.0
  %432 = vmatpush2.msra.mxu0 0.0
  %433 = vmatprep.subr.mxu0 0.0
  %434 = vmatpush2.msra.mxu0 0.0
  %435 = vmatprep.subr.mxu0 0.0
  %436 = vmatpush2.msra.mxu0 0.0
  %437 = vmatprep.subr.mxu0 0.0
  %438 = vmatpush2.msra.mxu0 %v388
  %439 = vmatprep.subr.mxu0 0.0
  %440 = vmatpush2.msra.mxu0 %v387
  %441 = vmatprep.subr.mxu0 0.0
  %442 = vmatpush2.msra.mxu0 %v386
  %443 = vmatprep.subr.mxu0 0.0
  %444 = vmatpush2.msra.mxu0 %v385
  %445 = vmatprep.subr.mxu0 0.0
  %446 = vmatpush2.msra.mxu0 %v384
  %447 = vmatprep.subr.mxu0 0.0
  %448 = vmatpush2.msra.mxu0 %v383
  %449 = vmatprep.subr.mxu0 0.0
  %450 = vmatpush2.msra.mxu0 %v382
  %451 = vmatprep.subr.mxu0 0.0
  %452 = vmatpush2.msra.mxu0 %v381
  %453 = vmatprep.mubr.f32.mxu0 %v48
  %454 = vmatmul.mubr.f32.gmra.mxu0 %v14
  %v455 = vpop.f32.mrf.mxu0
  %v456 = vadd.f32 0.0, %v455
  %v457 = vpop.f32.mrf.mxu0
  %458 = vmatprep.mubr.f32.mxu0 %v51
  %459 = vmatmul.mubr.f32.gmra.mxu0 %v16
  %v460 = vpop.f32.mrf.mxu0
  %v461 = vadd.f32 0.0, %v460
  %v462 = vpop.f32.mrf.mxu0
  %463 = vmatprep.mubr.f32.mxu0 %v54
  %464 = vmatmul.mubr.f32.gmra.mxu0 %v18
  %v465 = vpop.f32.mrf.mxu0
  %v466 = vadd.f32 0.0, %v465
  %v467 = vpop.f32.mrf.mxu0
  %468 = vmatprep.mubr.f32.mxu0 %v57
  %469 = vmatmul.mubr.f32.gmra.mxu0 %v20
  %v470 = vpop.f32.mrf.mxu0
  %v471 = vadd.f32 0.0, %v470
  %v472 = vpop.f32.mrf.mxu0
  %473 = vdwg.mxu0
  %v474 = vmax.f32 %v126, %v236
  %v475 = vmax.f32 %v131, %v241
  %v476 = vmax.f32 %v136, %v246
  %v477 = vmax.f32 %v141, %v251
  %v478 = vmax.f32 %v346, %v456
  %v479 = vmax.f32 %v351, %v461
  %v480 = vmax.f32 %v356, %v466
  %v481 = vmax.f32 %v361, %v471
  %v482 = vmax.f32 %v474, %v478
  %v483 = vmax.f32 %v475, %v479
  %v484 = vmax.f32 %v476, %v480
  %v485 = vmax.f32 %v477, %v481
  %v486 = vld [vmem:[%s2] sm:$0xff]
  %v487 = vld [vmem:[%s2 + $0x8] sm:$0xff]
  %v488 = vld [vmem:[%s2 + $0x10] sm:$0xff]
  %v489 = vld [vmem:[%s2 + $0x18] sm:$0xff]
  %491 = vset.pattern.permute.xlu0 0
  %492 = vperm.xlu0 %491, %v486
  %v493 = vpop.permute.xlu0 %492
  %496 = vset.pattern.permute.xlu0 0
  %497 = vperm.xlu0 %496, %v487
  %v498 = vpop.permute.xlu0 %497
  %501 = vset.pattern.permute.xlu0 0
  %502 = vperm.xlu0 %501, %v488
  %v503 = vpop.permute.xlu0 %502
  %506 = vset.pattern.permute.xlu0 0
  %507 = vperm.xlu0 %506, %v489
  %v508 = vpop.permute.xlu0 %507
  %v510 = vadd.f32 %v482, %v493
  %v511 = vadd.f32 %v483, %v498
  %v512 = vadd.f32 %v484, %v503
  %v513 = vadd.f32 %v485, %v508
  %v514 = vmax.f32 %v510, 0.0
  %v515 = vmax.f32 %v511, 0.0
  %v516 = vmax.f32 %v512, 0.0
  %v517 = vmax.f32 %v513, 0.0
  %518 = vst [vmem:[%s3] sm:$0xff] %v514
  %519 = vst [vmem:[%s3 + $0x8] sm:$0xff] %v515
  %520 = vst [vmem:[%s3 + $0x10] sm:$0xff] %v516
  %521 = vst [vmem:[%s3 + $0x18] sm:$0xff] %v517
  // Predicated region
  $region14: #{regional_cnn_forward.4} parent=0 // pred_check
    _
  $region15: #{regional_cnn_forward.4} parent=0 // pred_check_branch
    %523 = sbr.rel (0) target = $region17
  $region16: #{regional_cnn_forward.4} parent=0 // pred_region
    _
  $region17: #{regional_cnn_forward.4} parent=0 // pred_fallthru
    _
  // Predicated region
  $region18: #{regional_cnn_forward.4} parent=0 // pred_check
    _
  $region19: #{regional_cnn_forward.4} parent=0 // pred_check_branch
    %525 = sbr.rel (0) target = $region21
  $region20: #{regional_cnn_forward.4} parent=0 // pred_region
    _
  $region21: #{regional_cnn_forward.4} parent=0 // pred_fallthru
    _

// kernel: regional_cnn_forward.5
$region0: #{regional_cnn_forward.5}
  #allocation0 [shape = 'u32[]', space=smem, size = 0x4, offset = 0x4, fixed_abs, tag = 'smem constant byte address 0x4 - core index']
  #allocation1 [shape = 'u32[144,128]{1,0:T(1,128)}', space=vmem, size = 0x12000, scoped, tag = 'internal scratch']
  %s0 = inlined_call_operand.vmem [shape: f32[4,96,128], index: 0, kind: input, shape index: {}]
  %s1 = inlined_call_operand.vmem [shape: f32[16,96], index: 1, kind: input, shape index: {}]
  %s2 = inlined_call_operand.vmem [shape: f32[16,1], index: 2, kind: input, shape index: {}]
  %s3 = inlined_call_operand.vmem [shape: f32[16,128], index: 3, kind: output, shape index: {}]
  %s4 = sld [smem:[#allocation0]]
  $region22: #{regional_cnn_forward.5} parent=0
    _
  %s6 = ssub.s32 1, %s4
  %s7 = scalar_select 0, %s6, %s4
  // Predicated region
  $region2: #{regional_cnn_forward.5} parent=0 // pred_check
    _
  $region3: #{regional_cnn_forward.5} parent=0 // pred_check_branch
    %9 = sbr.rel (0) target = $region5
  $region4: #{regional_cnn_forward.5} parent=0 // pred_region
    _
  $region5: #{regional_cnn_forward.5} parent=0 // pred_fallthru
    _
  // Predicated region
  $region6: #{regional_cnn_forward.5} parent=0 // pred_check
    _
  $region7: #{regional_cnn_forward.5} parent=0 // pred_check_branch
    %11 = sbr.rel (0) target = $region9
  $region8: #{regional_cnn_forward.5} parent=0 // pred_region
    _
  $region9: #{regional_cnn_forward.5} parent=0 // pred_fallthru
    _
  // Predicated region
  $region10: #{regional_cnn_forward.5} parent=0 // pred_check
    _
  $region11: #{regional_cnn_forward.5} parent=0 // pred_check_branch
    %13 = sbr.rel (0) target = $region13
  $region12: #{regional_cnn_forward.5} parent=0 // pred_region
    _
  $region13: #{regional_cnn_forward.5} parent=0 // pred_fallthru
    _
  %v14 = vld [vmem:[%s1] sm:$0xff]
  %v15 = vld [vmem:[%s1 + $0x8] sm:$0xff]
  %v16 = vld [vmem:[%s0] sm:$0xff]
  %v17 = vld [vmem:[%s0 + $0x8] sm:$0xff]
  %v18 = vld [vmem:[%s0 + $0x10] sm:$0xff]
  %v19 = vld [vmem:[%s0 + $0x18] sm:$0xff]
  %v20 = vld [vmem:[%s0 + $0x20] sm:$0xff]
  %v21 = vld [vmem:[%s0 + $0x28] sm:$0xff]
  %v22 = vld [vmem:[%s0 + $0x30] sm:$0xff]
  %v23 = vld [vmem:[%s0 + $0x38] sm:$0xff]
  %v24 = vld [vmem:[%s0 + $0x40] sm:$0xff]
  %v25 = vld [vmem:[%s0 + $0x48] sm:$0xff]
  %v26 = vld [vmem:[%s0 + $0x50] sm:$0xff]
  %v27 = vld [vmem:[%s0 + $0x58] sm:$0xff]
  %vm28 = vcmask 785408
  %v30 = vsel %vm28, %v14, 0
  %v33 = vsel %vm28, %v15, 0
  %35 = vmatprep.subr.mxu0 0.0
  %36 = vmatpush1.msra.mxu0 0.0
  %37 = vmatprep.subr.mxu0 0.0
  %38 = vmatpush1.msra.mxu0 0.0
  %39 = vmatprep.subr.mxu0 0.0
  %40 = vmatpush1.msra.mxu0 0.0
  %41 = vmatprep.subr.mxu0 0.0
  %42 = vmatpush1.msra.mxu0 0.0
  %43 = vmatprep.subr.mxu0 0.0
  %44 = vmatpush1.msra.mxu0 %v27
  %45 = vmatprep.subr.mxu0 0.0
  %46 = vmatpush1.msra.mxu0 %v26
  %47 = vmatprep.subr.mxu0 0.0
  %48 = vmatpush1.msra.mxu0 %v25
  %49 = vmatprep.subr.mxu0 0.0
  %50 = vmatpush1.msra.mxu0 %v24
  %51 = vmatprep.subr.mxu0 0.0
  %52 = vmatpush1.msra.mxu0 %v23
  %53 = vmatprep.subr.mxu0 0.0
  %54 = vmatpush1.msra.mxu0 %v22
  %55 = vmatprep.subr.mxu0 0.0
  %56 = vmatpush1.msra.mxu0 %v21
  %57 = vmatprep.subr.mxu0 0.0
  %58 = vmatpush1.msra.mxu0 %v20
  %59 = vmatprep.subr.mxu0 0.0
  %60 = vmatpush1.msra.mxu0 %v19
  %61 = vmatprep.subr.mxu0 0.0
  %62 = vmatpush1.msra.mxu0 %v18
  %63 = vmatprep.subr.mxu0 0.0
  %64 = vmatpush1.msra.mxu0 %v17
  %65 = vmatprep.subr.mxu0 0.0
  %66 = vmatpush1.msra.mxu0 %v16
  %67 = vmatprep.subr.mxu0 0.0
  %68 = vmatpush2.msra.mxu0 0.0
  %69 = vmatprep.subr.mxu0 0.0
  %70 = vmatpush2.msra.mxu0 0.0
  %71 = vmatprep.subr.mxu0 0.0
  %72 = vmatpush2.msra.mxu0 0.0
  %73 = vmatprep.subr.mxu0 0.0
  %74 = vmatpush2.msra.mxu0 0.0
  %75 = vmatprep.subr.mxu0 0.0
  %76 = vmatpush2.msra.mxu0 0.0
  %77 = vmatprep.subr.mxu0 0.0
  %78 = vmatpush2.msra.mxu0 0.0
  %79 = vmatprep.subr.mxu0 0.0
  %80 = vmatpush2.msra.mxu0 0.0
  %81 = vmatprep.subr.mxu0 0.0
  %82 = vmatpush2.msra.mxu0 0.0
  %83 = vmatprep.subr.mxu0 0.0
  %84 = vmatpush2.msra.mxu0 0.0
  %85 = vmatprep.subr.mxu0 0.0
  %86 = vmatpush2.msra.mxu0 0.0
  %87 = vmatprep.subr.mxu0 0.0
  %88 = vmatpush2.msra.mxu0 0.0
  %89 = vmatprep.subr.mxu0 0.0
  %90 = vmatpush2.msra.mxu0 0.0
  %91 = vmatprep.subr.mxu0 0.0
  %92 = vmatpush2.msra.mxu0 0.0
  %93 = vmatprep.subr.mxu0 0.0
  %94 = vmatpush2.msra.mxu0 0.0
  %95 = vmatprep.subr.mxu0 0.0
  %96 = vmatpush2.msra.mxu0 0.0
  %97 = vmatprep.subr.mxu0 0.0
  %98 = vmatpush2.msra.mxu0 0.0
  %99 = vmatprep.mubr.f32.mxu0 0.0
  %100 = vmatmul.mubr.f32.gmra.mxu0 %v30
  %v101 = vpop.f32.mrf.mxu0
  %v102 = vadd.f32 0.0, %v101
  %v103 = vpop.f32.mrf.mxu0
  %104 = vmatprep.mubr.f32.mxu0 0.0
  %105 = vmatmul.mubr.f32.gmra.mxu0 %v33
  %v106 = vpop.f32.mrf.mxu0
  %v107 = vadd.f32 0.0, %v106
  %v108 = vpop.f32.mrf.mxu0
  %109 = vdwg.mxu0
  %s110 = scalar_lea.vmem %s0, 96
  %v111 = vld [vmem:[%s110] sm:$0xff]
  %v112 = vld [vmem:[%s110 + $0x8] sm:$0xff]
  %v113 = vld [vmem:[%s110 + $0x10] sm:$0xff]
  %v114 = vld [vmem:[%s110 + $0x18] sm:$0xff]
  %v115 = vld [vmem:[%s110 + $0x20] sm:$0xff]
  %v116 = vld [vmem:[%s110 + $0x28] sm:$0xff]
  %v117 = vld [vmem:[%s110 + $0x30] sm:$0xff]
  %v118 = vld [vmem:[%s110 + $0x38] sm:$0xff]
  %v119 = vld [vmem:[%s110 + $0x40] sm:$0xff]
  %v120 = vld [vmem:[%s110 + $0x48] sm:$0xff]
  %v121 = vld [vmem:[%s110 + $0x50] sm:$0xff]
  %v122 = vld [vmem:[%s110 + $0x58] sm:$0xff]
  %123 = vmatprep.subr.mxu0 0.0
  %124 = vmatpush1.msra.mxu0 0.0
  %125 = vmatprep.subr.mxu0 0.0
  %126 = vmatpush1.msra.mxu0 0.0
  %127 = vmatprep.subr.mxu0 0.0
  %128 = vmatpush1.msra.mxu0 0.0
  %129 = vmatprep.subr.mxu0 0.0
  %130 = vmatpush1.msra.mxu0 0.0
  %131 = vmatprep.subr.mxu0 0.0
  %132 = vmatpush1.msra.mxu0 %v122
  %133 = vmatprep.subr.mxu0 0.0
  %134 = vmatpush1.msra.mxu0 %v121
  %135 = vmatprep.subr.mxu0 0.0
  %136 = vmatpush1.msra.mxu0 %v120
  %137 = vmatprep.subr.mxu0 0.0
  %138 = vmatpush1.msra.mxu0 %v119
  %139 = vmatprep.subr.mxu0 0.0
  %140 = vmatpush1.msra.mxu0 %v118
  %141 = vmatprep.subr.mxu0 0.0
  %142 = vmatpush1.msra.mxu0 %v117
  %143 = vmatprep.subr.mxu0 0.0
  %144 = vmatpush1.msra.mxu0 %v116
  %145 = vmatprep.subr.mxu0 0.0
  %146 = vmatpush1.msra.mxu0 %v115
  %147 = vmatprep.subr.mxu0 0.0
  %148 = vmatpush1.msra.mxu0 %v114
  %149 = vmatprep.subr.mxu0 0.0
  %150 = vmatpush1.msra.mxu0 %v113
  %151 = vmatprep.subr.mxu0 0.0
  %152 = vmatpush1.msra.mxu0 %v112
  %153 = vmatprep.subr.mxu0 0.0
  %154 = vmatpush1.msra.mxu0 %v111
  %155 = vmatprep.subr.mxu0 0.0
  %156 = vmatpush2.msra.mxu0 0.0
  %157 = vmatprep.subr.mxu0 0.0
  %158 = vmatpush2.msra.mxu0 0.0
  %159 = vmatprep.subr.mxu0 0.0
  %160 = vmatpush2.msra.mxu0 0.0
  %161 = vmatprep.subr.mxu0 0.0
  %162 = vmatpush2.msra.mxu0 0.0
  %163 = vmatprep.subr.mxu0 0.0
  %164 = vmatpush2.msra.mxu0 0.0
  %165 = vmatprep.subr.mxu0 0.0
  %166 = vmatpush2.msra.mxu0 0.0
  %167 = vmatprep.subr.mxu0 0.0
  %168 = vmatpush2.msra.mxu0 0.0
  %169 = vmatprep.subr.mxu0 0.0
  %170 = vmatpush2.msra.mxu0 0.0
  %171 = vmatprep.subr.mxu0 0.0
  %172 = vmatpush2.msra.mxu0 0.0
  %173 = vmatprep.subr.mxu0 0.0
  %174 = vmatpush2.msra.mxu0 0.0
  %175 = vmatprep.subr.mxu0 0.0
  %176 = vmatpush2.msra.mxu0 0.0
  %177 = vmatprep.subr.mxu0 0.0
  %178 = vmatpush2.msra.mxu0 0.0
  %179 = vmatprep.subr.mxu0 0.0
  %180 = vmatpush2.msra.mxu0 0.0
  %181 = vmatprep.subr.mxu0 0.0
  %182 = vmatpush2.msra.mxu0 0.0
  %183 = vmatprep.subr.mxu0 0.0
  %184 = vmatpush2.msra.mxu0 0.0
  %185 = vmatprep.subr.mxu0 0.0
  %186 = vmatpush2.msra.mxu0 0.0
  %187 = vmatprep.mubr.f32.mxu0 0.0
  %188 = vmatmul.mubr.f32.gmra.mxu0 %v30
  %v189 = vpop.f32.mrf.mxu0
  %v190 = vadd.f32 0.0, %v189
  %v191 = vpop.f32.mrf.mxu0
  %192 = vmatprep.mubr.f32.mxu0 0.0
  %193 = vmatmul.mubr.f32.gmra.mxu0 %v33
  %v194 = vpop.f32.mrf.mxu0
  %v195 = vadd.f32 0.0, %v194
  %v196 = vpop.f32.mrf.mxu0
  %197 = vdwg.mxu0
  %s198 = scalar_lea.vmem %s0, 192
  %v199 = vld [vmem:[%s198] sm:$0xff]
  %v200 = vld [vmem:[%s198 + $0x8] sm:$0xff]
  %v201 = vld [vmem:[%s198 + $0x10] sm:$0xff]
  %v202 = vld [vmem:[%s198 + $0x18] sm:$0xff]
  %v203 = vld [vmem:[%s198 + $0x20] sm:$0xff]
  %v204 = vld [vmem:[%s198 + $0x28] sm:$0xff]
  %v205 = vld [vmem:[%s198 + $0x30] sm:$0xff]
  %v206 = vld [vmem:[%s198 + $0x38] sm:$0xff]
  %v207 = vld [vmem:[%s198 + $0x40] sm:$0xff]
  %v208 = vld [vmem:[%s198 + $0x48] sm:$0xff]
  %v209 = vld [vmem:[%s198 + $0x50] sm:$0xff]
  %v210 = vld [vmem:[%s198 + $0x58] sm:$0xff]
  %211 = vmatprep.subr.mxu0 0.0
  %212 = vmatpush1.msra.mxu0 0.0
  %213 = vmatprep.subr.mxu0 0.0
  %214 = vmatpush1.msra.mxu0 0.0
  %215 = vmatprep.subr.mxu0 0.0
  %216 = vmatpush1.msra.mxu0 0.0
  %217 = vmatprep.subr.mxu0 0.0
  %218 = vmatpush1.msra.mxu0 0.0
  %219 = vmatprep.subr.mxu0 0.0
  %220 = vmatpush1.msra.mxu0 %v210
  %221 = vmatprep.subr.mxu0 0.0
  %222 = vmatpush1.msra.mxu0 %v209
  %223 = vmatprep.subr.mxu0 0.0
  %224 = vmatpush1.msra.mxu0 %v208
  %225 = vmatprep.subr.mxu0 0.0
  %226 = vmatpush1.msra.mxu0 %v207
  %227 = vmatprep.subr.mxu0 0.0
  %228 = vmatpush1.msra.mxu0 %v206
  %229 = vmatprep.subr.mxu0 0.0
  %230 = vmatpush1.msra.mxu0 %v205
  %231 = vmatprep.subr.mxu0 0.0
  %232 = vmatpush1.msra.mxu0 %v204
  %233 = vmatprep.subr.mxu0 0.0
  %234 = vmatpush1.msra.mxu0 %v203
  %235 = vmatprep.subr.mxu0 0.0
  %236 = vmatpush1.msra.mxu0 %v202
  %237 = vmatprep.subr.mxu0 0.0
  %238 = vmatpush1.msra.mxu0 %v201
  %239 = vmatprep.subr.mxu0 0.0
  %240 = vmatpush1.msra.mxu0 %v200
  %241 = vmatprep.subr.mxu0 0.0
  %242 = vmatpush1.msra.mxu0 %v199
  %243 = vmatprep.subr.mxu0 0.0
  %244 = vmatpush2.msra.mxu0 0.0
  %245 = vmatprep.subr.mxu0 0.0
  %246 = vmatpush2.msra.mxu0 0.0
  %247 = vmatprep.subr.mxu0 0.0
  %248 = vmatpush2.msra.mxu0 0.0
  %249 = vmatprep.subr.mxu0 0.0
  %250 = vmatpush2.msra.mxu0 0.0
  %251 = vmatprep.subr.mxu0 0.0
  %252 = vmatpush2.msra.mxu0 0.0
  %253 = vmatprep.subr.mxu0 0.0
  %254 = vmatpush2.msra.mxu0 0.0
  %255 = vmatprep.subr.mxu0 0.0
  %256 = vmatpush2.msra.mxu0 0.0
  %257 = vmatprep.subr.mxu0 0.0
  %258 = vmatpush2.msra.mxu0 0.0
  %259 = vmatprep.subr.mxu0 0.0
  %260 = vmatpush2.msra.mxu0 0.0
  %261 = vmatprep.subr.mxu0 0.0
  %262 = vmatpush2.msra.mxu0 0.0
  %263 = vmatprep.subr.mxu0 0.0
  %264 = vmatpush2.msra.mxu0 0.0
  %265 = vmatprep.subr.mxu0 0.0
  %266 = vmatpush2.msra.mxu0 0.0
  %267 = vmatprep.subr.mxu0 0.0
  %268 = vmatpush2.msra.mxu0 0.0
  %269 = vmatprep.subr.mxu0 0.0
  %270 = vmatpush2.msra.mxu0 0.0
  %271 = vmatprep.subr.mxu0 0.0
  %272 = vmatpush2.msra.mxu0 0.0
  %273 = vmatprep.subr.mxu0 0.0
  %274 = vmatpush2.msra.mxu0 0.0
  %275 = vmatprep.mubr.f32.mxu0 0.0
  %276 = vmatmul.mubr.f32.gmra.mxu0 %v30
  %v277 = vpop.f32.mrf.mxu0
  %v278 = vadd.f32 0.0, %v277
  %v279 = vpop.f32.mrf.mxu0
  %280 = vmatprep.mubr.f32.mxu0 0.0
  %281 = vmatmul.mubr.f32.gmra.mxu0 %v33
  %v282 = vpop.f32.mrf.mxu0
  %v283 = vadd.f32 0.0, %v282
  %v284 = vpop.f32.mrf.mxu0
  %285 = vdwg.mxu0
  %s286 = scalar_lea.vmem %s0, 288
  %v287 = vld [vmem:[%s286] sm:$0xff]
  %v288 = vld [vmem:[%s286 + $0x8] sm:$0xff]
  %v289 = vld [vmem:[%s286 + $0x10] sm:$0xff]
  %v290 = vld [vmem:[%s286 + $0x18] sm:$0xff]
  %v291 = vld [vmem:[%s286 + $0x20] sm:$0xff]
  %v292 = vld [vmem:[%s286 + $0x28] sm:$0xff]
  %v293 = vld [vmem:[%s286 + $0x30] sm:$0xff]
  %v294 = vld [vmem:[%s286 + $0x38] sm:$0xff]
  %v295 = vld [vmem:[%s286 + $0x40] sm:$0xff]
  %v296 = vld [vmem:[%s286 + $0x48] sm:$0xff]
  %v297 = vld [vmem:[%s286 + $0x50] sm:$0xff]
  %v298 = vld [vmem:[%s286 + $0x58] sm:$0xff]
  %299 = vmatprep.subr.mxu0 0.0
  %300 = vmatpush1.msra.mxu0 0.0
  %301 = vmatprep.subr.mxu0 0.0
  %302 = vmatpush1.msra.mxu0 0.0
  %303 = vmatprep.subr.mxu0 0.0
  %304 = vmatpush1.msra.mxu0 0.0
  %305 = vmatprep.subr.mxu0 0.0
  %306 = vmatpush1.msra.mxu0 0.0
  %307 = vmatprep.subr.mxu0 0.0
  %308 = vmatpush1.msra.mxu0 %v298
  %309 = vmatprep.subr.mxu0 0.0
  %310 = vmatpush1.msra.mxu0 %v297
  %311 = vmatprep.subr.mxu0 0.0
  %312 = vmatpush1.msra.mxu0 %v296
  %313 = vmatprep.subr.mxu0 0.0
  %314 = vmatpush1.msra.mxu0 %v295
  %315 = vmatprep.subr.mxu0 0.0
  %316 = vmatpush1.msra.mxu0 %v294
  %317 = vmatprep.subr.mxu0 0.0
  %318 = vmatpush1.msra.mxu0 %v293
  %319 = vmatprep.subr.mxu0 0.0
  %320 = vmatpush1.msra.mxu0 %v292
  %321 = vmatprep.subr.mxu0 0.0
  %322 = vmatpush1.msra.mxu0 %v291
  %323 = vmatprep.subr.mxu0 0.0
  %324 = vmatpush1.msra.mxu0 %v290
  %325 = vmatprep.subr.mxu0 0.0
  %326 = vmatpush1.msra.mxu0 %v289
  %327 = vmatprep.subr.mxu0 0.0
  %328 = vmatpush1.msra.mxu0 %v288
  %329 = vmatprep.subr.mxu0 0.0
  %330 = vmatpush1.msra.mxu0 %v287
  %331 = vmatprep.subr.mxu0 0.0
  %332 = vmatpush2.msra.mxu0 0.0
  %333 = vmatprep.subr.mxu0 0.0
  %334 = vmatpush2.msra.mxu0 0.0
  %335 = vmatprep.subr.mxu0 0.0
  %336 = vmatpush2.msra.mxu0 0.0
  %337 = vmatprep.subr.mxu0 0.0
  %338 = vmatpush2.msra.mxu0 0.0
  %339 = vmatprep.subr.mxu0 0.0
  %340 = vmatpush2.msra.mxu0 0.0
  %341 = vmatprep.subr.mxu0 0.0
  %342 = vmatpush2.msra.mxu0 0.0
  %343 = vmatprep.subr.mxu0 0.0
  %344 = vmatpush2.msra.mxu0 0.0
  %345 = vmatprep.subr.mxu0 0.0
  %346 = vmatpush2.msra.mxu0 0.0
  %347 = vmatprep.subr.mxu0 0.0
  %348 = vmatpush2.msra.mxu0 0.0
  %349 = vmatprep.subr.mxu0 0.0
  %350 = vmatpush2.msra.mxu0 0.0
  %351 = vmatprep.subr.mxu0 0.0
  %352 = vmatpush2.msra.mxu0 0.0
  %353 = vmatprep.subr.mxu0 0.0
  %354 = vmatpush2.msra.mxu0 0.0
  %355 = vmatprep.subr.mxu0 0.0
  %356 = vmatpush2.msra.mxu0 0.0
  %357 = vmatprep.subr.mxu0 0.0
  %358 = vmatpush2.msra.mxu0 0.0
  %359 = vmatprep.subr.mxu0 0.0
  %360 = vmatpush2.msra.mxu0 0.0
  %361 = vmatprep.subr.mxu0 0.0
  %362 = vmatpush2.msra.mxu0 0.0
  %363 = vmatprep.mubr.f32.mxu0 0.0
  %364 = vmatmul.mubr.f32.gmra.mxu0 %v30
  %v365 = vpop.f32.mrf.mxu0
  %v366 = vadd.f32 0.0, %v365
  %v367 = vpop.f32.mrf.mxu0
  %368 = vmatprep.mubr.f32.mxu0 0.0
  %369 = vmatmul.mubr.f32.gmra.mxu0 %v33
  %v370 = vpop.f32.mrf.mxu0
  %v371 = vadd.f32 0.0, %v370
  %v372 = vpop.f32.mrf.mxu0
  %373 = vdwg.mxu0
  %v374 = vmax.f32 %v102, %v190
  %v375 = vmax.f32 %v107, %v195
  %v376 = vmax.f32 %v278, %v366
  %v377 = vmax.f32 %v283, %v371
  %v378 = vmax.f32 %v374, %v376
  %v379 = vmax.f32 %v375, %v377
  %v380 = vld [vmem:[%s2] sm:$0xff]
  %v381 = vld [vmem:[%s2 + $0x8] sm:$0xff]
  %383 = vset.pattern.permute.xlu0 0
  %384 = vperm.xlu0 %383, %v380
  %v385 = vpop.permute.xlu0 %384
  %388 = vset.pattern.permute.xlu0 0
  %389 = vperm.xlu0 %388, %v381
  %v390 = vpop.permute.xlu0 %389
  %v392 = vadd.f32 %v378, %v385
  %v393 = vadd.f32 %v379, %v390
  %v394 = vmax.f32 %v392, 0.0
  %v395 = vmax.f32 %v393, 0.0
  %396 = vst [vmem:[%s3] sm:$0xff] %v394
  %397 = vst [vmem:[%s3 + $0x8] sm:$0xff] %v395
  // Predicated region
  $region14: #{regional_cnn_forward.5} parent=0 // pred_check
    _
  $region15: #{regional_cnn_forward.5} parent=0 // pred_check_branch
    %399 = sbr.rel (0) target = $region17
  $region16: #{regional_cnn_forward.5} parent=0 // pred_region
    _
  $region17: #{regional_cnn_forward.5} parent=0 // pred_fallthru
    _
  // Predicated region
  $region18: #{regional_cnn_forward.5} parent=0 // pred_check
    _
  $region19: #{regional_cnn_forward.5} parent=0 // pred_check_branch
    %401 = sbr.rel (0) target = $region21
  $region20: #{regional_cnn_forward.5} parent=0 // pred_region
    _
  $region21: #{regional_cnn_forward.5} parent=0 // pred_fallthru
    _

</llo_original>
